<compile_context>
chip_gen: v7x
topology: tpu7x:2x2x1
jax: 0.10.0
libtpu: 0.0.40
codegen_flags: <defaults>
</compile_context>

<pallas_src>
import functools

import numpy as np
import jax
import jax.numpy as jnp
from jax import lax
from jax.experimental import pallas as pl
from jax.experimental.pallas import tpu as pltpu


def _round_up(v, m):
    return (v + m - 1) // m * m


def _vmem_budget(mblk, cp, hp, k, maxp):
    f32b, bf16b = 4, 2
    io_blocks = 2 * 2 * mblk * cp * f32b                       # x + out, double-buffered
    weights = 2 * (cp * hp + hp * k * hp + hp * cp) * bf16b + 2 * 8 * maxp * f32b
    inter = mblk * (hp * (f32b + bf16b)                        # a1 + a1b
                    + k * hp * f32b                            # z (merged taps)
                    + 2 * hp * f32b                            # acc / a2
                    + 2 * cp * f32b)                           # a3 + residual
    est = io_blocks + weights + 2 * inter
    return int(min(max(est, 32 * 2 ** 20), 64 * 2 ** 20))


def _res_bottleneck_kernel(x_ref, w1_ref, w2_ref, w3_ref, vec_ref, o_ref, *,
                           ksize, dilation, seg_len, valid_len, nseg, hp, cp):
    f32, bf16 = jnp.float32, jnp.bfloat16

    def leaky(v):
        return jnp.where(v >= 0, v, 0.2 * v)

    # Packed per-channel vectors: rows 0..6 = b1, s1, t1, b2, b3f, s3, t3.
    vec = vec_ref[...]
    b1 = vec[0:1, :hp]
    s1 = vec[1:2, :hp]
    t1 = vec[2:3, :hp]
    b2 = vec[3:4, :hp]
    b3 = vec[4:5, :cp]
    s3 = vec[5:6, :cp]
    t3 = vec[6:7, :cp]

    x = x_ref[...]                        # (M, Cp) f32 — also the residual
    m = x.shape[0]

    # ---- conv1 (1x1) + LeakyReLU + BN1 (scale/shift) -----------------------
    a1 = jnp.dot(x.astype(bf16), w1_ref[...], preferred_element_type=f32) + b1
    a1 = leaky(a1) * s1 + t1

    # Zero padded rows of every batch segment so the dilated taps of conv2 see
    # true zero padding; (M, 1) mask broadcasts across lanes in the where.
    rows = lax.broadcasted_iota(jnp.int32, (m, 1), 0)
    valid = rows < valid_len
    for s in range(1, nseg):
        lo = s * seg_len
        valid = valid | ((rows >= lo) & (rows < lo + valid_len))
    a1 = jnp.where(valid, a1, 0.0)
    a1b = a1.astype(bf16)

    # ---- conv2 (dilated, K taps): ONE wide matmul, then XLU rolls + adds ---
    z = jnp.dot(a1b, w2_ref[...], preferred_element_type=f32)   # (M, K*Hp)
    center = (ksize - 1) // 2
    acc = z[:, center * hp:(center + 1) * hp]                   # off == 0 tap
    for j in range(ksize):                                      # static loop
        if j == center:
            continue
        off = dilation * (j - center)
        tap = z[:, j * hp:(j + 1) * hp]                         # lane-aligned slice
        # Segment padding rows are zero and >= halo wide, so the circular roll
        # never leaks data across batch boundaries (or around the ends).
        acc = acc + pltpu.roll(tap, shift=(-off) % m, axis=0)
    a2 = leaky(acc + b2)

    # ---- conv3 (1x1, BN2 pre-folded into weight/bias) + LeakyReLU + BN3 ----
    a3 = jnp.dot(a2.astype(bf16), w3_ref[...], preferred_element_type=f32) + b3
    a3 = leaky(a3) * s3 + t3

    # ---- residual add + final ReLU -----------------------------------------
    o_ref[...] = jnp.maximum(a3 + x, 0.0).astype(o_ref.dtype)


def res_bottleneck_block_pallas(x, params, *, kernel_size, dilation=1,
                                eps=1e-5, batch_block=None):
    """x: (B, C_in, L) float32; params: PyTorch-layout weights + BN stats."""
    B, C, L = x.shape
    H = params["w1"].shape[0]
    K = kernel_size
    assert K % 2 == 1, "same-length output requires an odd kernel_size"
    halo = (K - 1) // 2 * dilation

    if batch_block is None:
        batch_block = B                       # fuse all batches: one grid step
    n_blocks = -(-B // batch_block)
    Bp = n_blocks * batch_block

    Cp = _round_up(C, 128)                    # lane-dense channel dims (MXU/stores)
    Hp = _round_up(H, 128)
    Lp = _round_up(L + halo, 8)               # per-batch pad rows >= halo so the
                                              # roll-based taps never cross batches
    maxP = max(Cp, Hp)
    Mblk = batch_block * Lp

    f32, bf16 = jnp.float32, jnp.bfloat16

    # BatchNorm (inference, running stats) -> per-channel scale/shift.
    def bn_fold(prefix):
        s = params[prefix + "_gamma"] / jnp.sqrt(params[prefix + "_var"] + eps)
        t = params[prefix + "_beta"] - params[prefix + "_mean"] * s
        return s, t

    s1, t1 = bn_fold("bn1")
    s2, t2 = bn_fold("bn2")
    s3, t3 = bn_fold("bn3")

    # Conv weights -> (in, out) matmul layout.
    w1 = jnp.transpose(params["w1"][:, :, 0])          # (C, H)
    w3 = jnp.transpose(params["w3"][:, :, 0])          # (H, C)
    # Fold BN2 (scale AND shift) into conv3 (safe: conv3 is 1x1, no padding).
    w3f = w3 * s2[:, None]
    b3f = t2 @ w3 + params["b3"]

    def pad2(a, r, c):
        return jnp.pad(a, ((0, r - a.shape[0]), (0, c - a.shape[1])))

    w1_p = pad2(w1, Cp, Hp).astype(bf16)
    w3_p = pad2(w3f, Hp, Cp).astype(bf16)

    # Dilated-conv taps concatenated along the output dim -> (Hp, K*Hp).
    w2_t = jnp.transpose(params["w2"], (2, 1, 0))       # (K, H_in, H_out)
    w2_t = jnp.pad(w2_t, ((0, 0), (0, Hp - H), (0, Hp - H)))
    w2cat_p = jnp.transpose(w2_t, (1, 0, 2)).reshape(Hp, K * Hp).astype(bf16)

    # Pack all per-channel vectors into a single (8, maxP) block (1 DMA, not 7).
    def row(a):
        return jnp.pad(a.astype(f32), (0, maxP - a.shape[0]))

    vec_p = jnp.stack([row(params["b1"]), row(s1), row(t1), row(params["b2"]),
                       row(b3f), row(s3), row(t3),
                       jnp.zeros((maxP,), f32)], axis=0)

    # (B, C, L) -> channels-last fused slab (Bp*Lp, Cp), zero-padded.
    x_t = jnp.transpose(x, (0, 2, 1)).astype(f32)
    x_p = jnp.pad(x_t, ((0, Bp - B), (0, Lp - L), (0, Cp - C)))
    x_2d = x_p.reshape(Bp * Lp, Cp)

    kernel = functools.partial(_res_bottleneck_kernel, ksize=K,
                               dilation=dilation, seg_len=Lp, valid_len=L,
                               nseg=batch_block, hp=Hp, cp=Cp)

    const = lambda i: (0, 0)                 # resident weights: no re-DMA per step
    vmem_bytes = _vmem_budget(Mblk, Cp, Hp, K, maxP)

    out2d = pl.pallas_call(
        kernel,
        out_shape=jax.ShapeDtypeStruct((Bp * Lp, Cp), f32),
        grid_spec=pltpu.PrefetchScalarGridSpec(
            num_scalar_prefetch=0,
            grid=(n_blocks,),
            in_specs=[
                pl.BlockSpec((Mblk, Cp), lambda i: (i, 0)),      # activations
                pl.BlockSpec((Cp, Hp), const),                   # w1
                pl.BlockSpec((Hp, K * Hp), const),               # w2 (taps concat)
                pl.BlockSpec((Hp, Cp), const),                   # w3 (BN2 folded)
                pl.BlockSpec((8, maxP), const),                  # packed biases/BN
            ],
            out_specs=pl.BlockSpec((Mblk, Cp), lambda i: (i, 0)),
        ),
        compiler_params=pltpu.CompilerParams(
            dimension_semantics=("parallel",),
            vmem_limit_bytes=vmem_bytes),
    )(x_2d, w1_p, w2cat_p, w3_p, vec_p)

    # Strip padding, back to (B, C, L).
    out = out2d.reshape(Bp, Lp, Cp)[:B, :L, :C]
    return jnp.transpose(out, (0, 2, 1))


def res_bottleneck_block_ref(x, params, *, kernel_size, dilation=1, eps=1e-5):
    """Pure-JAX re-implementation of the PyTorch forward (inference-mode BN)."""
    def leaky(v):
        return jnp.where(v >= 0, v, 0.2 * v)

    def bn(v, prefix):
        g = params[prefix + "_gamma"][None, :, None]
        b = params[prefix + "_beta"][None, :, None]
        m = params[prefix + "_mean"][None, :, None]
        var = params[prefix + "_var"][None, :, None]
        return (v - m) / jnp.sqrt(var + eps) * g + b

    def conv(v, w, b, dil):
        k = w.shape[-1]
        pad = (k - 1) // 2 * dil
        y = lax.conv_general_dilated(
            v, w, window_strides=(1,), padding=[(pad, pad)],
            rhs_dilation=(dil,), dimension_numbers=("NCH", "OIH", "NCH"))
        return y + b[None, :, None]

    out = bn(leaky(conv(x, params["w1"], params["b1"], 1)), "bn1")
    out = bn(leaky(conv(out, params["w2"], params["b2"], dilation)), "bn2")
    out = bn(leaky(conv(out, params["w3"], params["b3"], 1)), "bn3")
    return jnp.maximum(out + x, 0.0)


if __name__ == "__main__":
    # Shapes from the module docstring example: block(64, 128, 3, 1, True).
    B, C, H, L = 2, 64, 128, 100
    K = 3
    f32 = jnp.float32

    key = jax.random.PRNGKey(0)
    ks = jax.random.split(key, 19)
    params = {
        "w1": jax.random.normal(ks[0], (H, C, 1), f32) / np.sqrt(C),
        "b1": jax.random.normal(ks[1], (H,), f32) * 0.05,
        "w2": jax.random.normal(ks[2], (H, H, K), f32) / np.sqrt(H * K),
        "b2": jax.random.normal(ks[3], (H,), f32) * 0.05,
        "w3": jax.random.normal(ks[4], (C, H, 1), f32) / np.sqrt(H),
        "b3": jax.random.normal(ks[5], (C,), f32) * 0.05,
        "bn1_gamma": 1.0 + 0.1 * jax.random.normal(ks[6], (H,), f32),
        "bn1_beta": 0.1 * jax.random.normal(ks[7], (H,), f32),
        "bn1_mean": 0.1 * jax.random.normal(ks[8], (H,), f32),
        "bn1_var": jax.random.uniform(ks[9], (H,), f32, 0.5, 1.5),
        "bn2_gamma": 1.0 + 0.1 * jax.random.normal(ks[10], (H,), f32),
        "bn2_beta": 0.1 * jax.random.normal(ks[11], (H,), f32),
        "bn2_mean": 0.1 * jax.random.normal(ks[12], (H,), f32),
        "bn2_var": jax.random.uniform(ks[13], (H,), f32, 0.5, 1.5),
        "bn3_gamma": 1.0 + 0.1 * jax.random.normal(ks[14], (C,), f32),
        "bn3_beta": 0.1 * jax.random.normal(ks[15], (C,), f32),
        "bn3_mean": 0.1 * jax.random.normal(ks[16], (C,), f32),
        "bn3_var": jax.random.uniform(ks[17], (C,), f32, 0.5, 1.5),
    }
    x = jax.random.normal(ks[18], (B, C, L), f32)

    # Exercise both dilation=1 and dilation=2 (checks the roll offsets and the
    # per-batch halo padding of the fused-batch path).
    for dil in (1, 2):
        fwd = jax.jit(functools.partial(res_bottleneck_block_pallas,
                                        kernel_size=K, dilation=dil))
        out = jax.block_until_ready(fwd(x, params))
        ref = res_bottleneck_block_ref(x, params, kernel_size=K, dilation=dil)
        # bf16 MXU inputs (f32 accumulation) -> slightly looser tolerance.
        np.testing.assert_allclose(np.asarray(out), np.asarray(ref),
                                   rtol=5e-2, atol=5e-2)

    print("KERNEL_OK")
</pallas_src>

<mosaic_0001>
module attributes {stable_mosaic.version = 11 : i64} {
  func.func @_res_bottleneck_kernel(%arg0: i32, %arg1: memref<208x128xf32, #tpu.memory_space<vmem>>, %arg2: memref<128x128xbf16, #tpu.memory_space<vmem>>, %arg3: memref<128x384xbf16, #tpu.memory_space<vmem>>, %arg4: memref<128x128xbf16, #tpu.memory_space<vmem>>, %arg5: memref<8x128xf32, #tpu.memory_space<vmem>>, %arg6: memref<208x128xf32, #tpu.memory_space<vmem>>) attributes {dimension_semantics = [#tpu.dimension_semantics<parallel>], iteration_bounds = array<i64: 1>, scalar_prefetch = 0 : i64, scratch_operands = 0 : i64, tpu.core_type = #tpu.core_type<tc>, window_params = [{transform_indices = @transform_0, window_bounds = array<i64: 208, 128>}, {pipeline_mode = #tpu.pipeline_mode<synchronous>, transform_indices = @transform_1, window_bounds = array<i64: 128, 128>}, {pipeline_mode = #tpu.pipeline_mode<synchronous>, transform_indices = @transform_2, window_bounds = array<i64: 128, 384>}, {pipeline_mode = #tpu.pipeline_mode<synchronous>, transform_indices = @transform_3, window_bounds = array<i64: 128, 128>}, {pipeline_mode = #tpu.pipeline_mode<synchronous>, transform_indices = @transform_4, window_bounds = array<i64: 8, 128>}, {transform_indices = @transform_5, window_bounds = array<i64: 208, 128>}]} {
    %c0 = arith.constant 0 : index
    %c0_0 = arith.constant 0 : index
    %0 = vector.load %arg5[%c0, %c0_0] : memref<8x128xf32, #tpu.memory_space<vmem>>, vector<8x128xf32>
    %1 = vector.extract_strided_slice %0 {offsets = [0, 0], sizes = [1, 128], strides = [1, 1]} : vector<8x128xf32> to vector<1x128xf32>
    %2 = vector.extract_strided_slice %0 {offsets = [1, 0], sizes = [1, 128], strides = [1, 1]} : vector<8x128xf32> to vector<1x128xf32>
    %3 = vector.extract_strided_slice %0 {offsets = [2, 0], sizes = [1, 128], strides = [1, 1]} : vector<8x128xf32> to vector<1x128xf32>
    %4 = vector.extract_strided_slice %0 {offsets = [3, 0], sizes = [1, 128], strides = [1, 1]} : vector<8x128xf32> to vector<1x128xf32>
    %5 = vector.extract_strided_slice %0 {offsets = [4, 0], sizes = [1, 128], strides = [1, 1]} : vector<8x128xf32> to vector<1x128xf32>
    %6 = vector.extract_strided_slice %0 {offsets = [5, 0], sizes = [1, 128], strides = [1, 1]} : vector<8x128xf32> to vector<1x128xf32>
    %7 = vector.extract_strided_slice %0 {offsets = [6, 0], sizes = [1, 128], strides = [1, 1]} : vector<8x128xf32> to vector<1x128xf32>
    %c0_1 = arith.constant 0 : index
    %c0_2 = arith.constant 0 : index
    %8 = vector.load %arg1[%c0_1, %c0_2] : memref<208x128xf32, #tpu.memory_space<vmem>>, vector<208x128xf32>
    %9 = arith.truncf %8 : vector<208x128xf32> to vector<208x128xbf16>
    %c0_3 = arith.constant 0 : index
    %c0_4 = arith.constant 0 : index
    %10 = vector.load %arg2[%c0_3, %c0_4] : memref<128x128xbf16, #tpu.memory_space<vmem>>, vector<128x128xbf16>
    %cst = arith.constant dense<0.000000e+00> : vector<208x128xf32>
    %11 = tpu.matmul %9, %10, %cst {dimension_numbers = #tpu.dot_dimension_numbers<[1], [0], [0], [1], [0, 0, 1, 1], [], []>} : vector<208x128xbf16>, vector<128x128xbf16>, vector<208x128xf32> -> vector<208x128xf32>
    %12 = vector.broadcast %1 : vector<1x128xf32> to vector<208x128xf32>
    %13 = arith.addf %11, %12 : vector<208x128xf32>
    %cst_5 = arith.constant 0.000000e+00 : f32
    %14 = vector.broadcast %cst_5 : f32 to vector<208x128xf32>
    %15 = arith.cmpf oge, %13, %14 : vector<208x128xf32>
    %cst_6 = arith.constant 2.000000e-01 : f32
    %16 = vector.broadcast %cst_6 : f32 to vector<208x128xf32>
    %17 = arith.mulf %16, %13 : vector<208x128xf32>
    %18 = arith.select %15, %13, %17 : vector<208x128xi1>, vector<208x128xf32>
    %19 = vector.broadcast %2 : vector<1x128xf32> to vector<208x128xf32>
    %20 = arith.mulf %18, %19 : vector<208x128xf32>
    %21 = vector.broadcast %3 : vector<1x128xf32> to vector<208x128xf32>
    %22 = arith.addf %20, %21 : vector<208x128xf32>
    %23 = tpu.iota {dimensions = array<i32: 0>} : vector<208x1xi32>
    %c100_i32 = arith.constant 100 : i32
    %24 = vector.broadcast %c100_i32 : i32 to vector<208x1xi32>
    %25 = arith.cmpi slt, %23, %24 : vector<208x1xi32>
    %c104_i32 = arith.constant 104 : i32
    %26 = vector.broadcast %c104_i32 : i32 to vector<208x1xi32>
    %27 = arith.cmpi sge, %23, %26 : vector<208x1xi32>
    %c204_i32 = arith.constant 204 : i32
    %28 = vector.broadcast %c204_i32 : i32 to vector<208x1xi32>
    %29 = arith.cmpi slt, %23, %28 : vector<208x1xi32>
    %30 = arith.andi %27, %29 : vector<208x1xi1>
    %31 = arith.ori %25, %30 : vector<208x1xi1>
    %cst_7 = arith.constant 0.000000e+00 : f32
    %32 = vector.shape_cast %31 : vector<208x1xi1> to vector<208x1xi1>
    %33 = vector.broadcast %32 : vector<208x1xi1> to vector<208x128xi1>
    %34 = vector.broadcast %cst_7 : f32 to vector<208x128xf32>
    %35 = arith.select %33, %22, %34 : vector<208x128xi1>, vector<208x128xf32>
    %36 = arith.truncf %35 : vector<208x128xf32> to vector<208x128xbf16>
    %c0_8 = arith.constant 0 : index
    %c0_9 = arith.constant 0 : index
    %37 = vector.load %arg3[%c0_8, %c0_9] : memref<128x384xbf16, #tpu.memory_space<vmem>>, vector<128x384xbf16>
    %cst_10 = arith.constant dense<0.000000e+00> : vector<208x384xf32>
    %38 = tpu.matmul %36, %37, %cst_10 {dimension_numbers = #tpu.dot_dimension_numbers<[1], [0], [0], [1], [0, 0, 1, 1], [], []>} : vector<208x128xbf16>, vector<128x384xbf16>, vector<208x384xf32> -> vector<208x384xf32>
    %39 = vector.extract_strided_slice %38 {offsets = [0, 128], sizes = [208, 128], strides = [1, 1]} : vector<208x384xf32> to vector<208x128xf32>
    %40 = vector.extract_strided_slice %38 {offsets = [0, 0], sizes = [208, 128], strides = [1, 1]} : vector<208x384xf32> to vector<208x128xf32>
    %c1_i32 = arith.constant 1 : i32
    %41 = tpu.dynamic_rotate %40 by %c1_i32 dim 0 : vector<208x128xf32>, i32 -> vector<208x128xf32>
    %42 = arith.addf %39, %41 : vector<208x128xf32>
    %43 = vector.extract_strided_slice %38 {offsets = [0, 256], sizes = [208, 128], strides = [1, 1]} : vector<208x384xf32> to vector<208x128xf32>
    %c207_i32 = arith.constant 207 : i32
    %44 = tpu.dynamic_rotate %43 by %c207_i32 dim 0 : vector<208x128xf32>, i32 -> vector<208x128xf32>
    %45 = arith.addf %42, %44 : vector<208x128xf32>
    %46 = vector.broadcast %4 : vector<1x128xf32> to vector<208x128xf32>
    %47 = arith.addf %45, %46 : vector<208x128xf32>
    %cst_11 = arith.constant 0.000000e+00 : f32
    %48 = vector.broadcast %cst_11 : f32 to vector<208x128xf32>
    %49 = arith.cmpf oge, %47, %48 : vector<208x128xf32>
    %cst_12 = arith.constant 2.000000e-01 : f32
    %50 = vector.broadcast %cst_12 : f32 to vector<208x128xf32>
    %51 = arith.mulf %50, %47 : vector<208x128xf32>
    %52 = arith.select %49, %47, %51 : vector<208x128xi1>, vector<208x128xf32>
    %53 = arith.truncf %52 : vector<208x128xf32> to vector<208x128xbf16>
    %c0_13 = arith.constant 0 : index
    %c0_14 = arith.constant 0 : index
    %54 = vector.load %arg4[%c0_13, %c0_14] : memref<128x128xbf16, #tpu.memory_space<vmem>>, vector<128x128xbf16>
    %cst_15 = arith.constant dense<0.000000e+00> : vector<208x128xf32>
    %55 = tpu.matmul %53, %54, %cst_15 {dimension_numbers = #tpu.dot_dimension_numbers<[1], [0], [0], [1], [0, 0, 1, 1], [], []>} : vector<208x128xbf16>, vector<128x128xbf16>, vector<208x128xf32> -> vector<208x128xf32>
    %56 = vector.broadcast %5 : vector<1x128xf32> to vector<208x128xf32>
    %57 = arith.addf %55, %56 : vector<208x128xf32>
    %cst_16 = arith.constant 0.000000e+00 : f32
    %58 = vector.broadcast %cst_16 : f32 to vector<208x128xf32>
    %59 = arith.cmpf oge, %57, %58 : vector<208x128xf32>
    %cst_17 = arith.constant 2.000000e-01 : f32
    %60 = vector.broadcast %cst_17 : f32 to vector<208x128xf32>
    %61 = arith.mulf %60, %57 : vector<208x128xf32>
    %62 = arith.select %59, %57, %61 : vector<208x128xi1>, vector<208x128xf32>
    %63 = vector.broadcast %6 : vector<1x128xf32> to vector<208x128xf32>
    %64 = arith.mulf %62, %63 : vector<208x128xf32>
    %65 = vector.broadcast %7 : vector<1x128xf32> to vector<208x128xf32>
    %66 = arith.addf %64, %65 : vector<208x128xf32>
    %67 = arith.addf %66, %8 : vector<208x128xf32>
    %cst_18 = arith.constant 0.000000e+00 : f32
    %68 = vector.broadcast %cst_18 : f32 to vector<208x128xf32>
    %69 = arith.maximumf %67, %68 : vector<208x128xf32>
    %c0_19 = arith.constant 0 : index
    %c0_20 = arith.constant 0 : index
    %70 = vector.load %arg6[%c0_19, %c0_20] : memref<208x128xf32, #tpu.memory_space<vmem>>, vector<208x128xf32>
    tpu.vector_store %arg6[%c0_19, %c0_20], %69 {strides = array<i32>} : memref<208x128xf32, #tpu.memory_space<vmem>>, vector<208x128xf32>,
    return
  }
  func.func @transform_0(%arg0: i32) -> (i32, i32) {
    %c0_i32 = arith.constant 0 : i32
    %c0_i32_0 = arith.constant 0 : i32
    return %arg0, %c0_i32 : i32, i32
  }
  func.func @transform_1(%arg0: i32) -> (i32, i32) {
    %c0_i32 = arith.constant 0 : i32
    %c0_i32_0 = arith.constant 0 : i32
    %c0_i32_1 = arith.constant 0 : i32
    return %c0_i32, %c0_i32_0 : i32, i32
  }
  func.func @transform_2(%arg0: i32) -> (i32, i32) {
    %c0_i32 = arith.constant 0 : i32
    %c0_i32_0 = arith.constant 0 : i32
    %c0_i32_1 = arith.constant 0 : i32
    return %c0_i32, %c0_i32_0 : i32, i32
  }
  func.func @transform_3(%arg0: i32) -> (i32, i32) {
    %c0_i32 = arith.constant 0 : i32
    %c0_i32_0 = arith.constant 0 : i32
    %c0_i32_1 = arith.constant 0 : i32
    return %c0_i32, %c0_i32_0 : i32, i32
  }
  func.func @transform_4(%arg0: i32) -> (i32, i32) {
    %c0_i32 = arith.constant 0 : i32
    %c0_i32_0 = arith.constant 0 : i32
    %c0_i32_1 = arith.constant 0 : i32
    return %c0_i32, %c0_i32_0 : i32, i32
  }
  func.func @transform_5(%arg0: i32) -> (i32, i32) {
    %c0_i32 = arith.constant 0 : i32
    %c0_i32_0 = arith.constant 0 : i32
    return %arg0, %c0_i32 : i32, i32
  }
}

</mosaic_0001>

<llo_original>
// kernel: res_bottleneck_block_pallas.1
$region0: #{res_bottleneck_block_pallas.1}
  #allocation0 [shape = 'u32[]', space=smem, size = 0x4, offset = 0x4, fixed_abs, tag = 'smem constant byte address 0x4 - core index']
  #allocation1 [shape = 'u32[144,128]{1,0:T(1,128)}', space=vmem, size = 0x12000, scoped, tag = 'internal scratch']
  %s0 = inlined_call_operand.vmem [shape: f32[208,128], index: 0, kind: input, shape index: {}]
  %s1 = inlined_call_operand.vmem [shape: bf16[128,128], index: 1, kind: input, shape index: {}]
  %s2 = inlined_call_operand.vmem [shape: bf16[128,384], index: 2, kind: input, shape index: {}]
  %s3 = inlined_call_operand.vmem [shape: bf16[128,128], index: 3, kind: input, shape index: {}]
  %s4 = inlined_call_operand.vmem [shape: f32[8,128], index: 4, kind: input, shape index: {}]
  %s5 = inlined_call_operand.vmem [shape: f32[208,128], index: 5, kind: output, shape index: {}]
  %s6 = sld [smem:[#allocation0]]
  $region30: #{res_bottleneck_block_pallas.1} parent=0
    _
  %s8 = ssub.s32 1, %s6
  %s9 = scalar_select 0, %s8, %s6
  // Predicated region
  $region2: #{res_bottleneck_block_pallas.1} parent=0 // pred_check
    _
  $region3: #{res_bottleneck_block_pallas.1} parent=0 // pred_check_branch
    %11 = sbr.rel (0) target = $region5
  $region4: #{res_bottleneck_block_pallas.1} parent=0 // pred_region
    _
  $region5: #{res_bottleneck_block_pallas.1} parent=0 // pred_fallthru
    _
  // Predicated region
  $region6: #{res_bottleneck_block_pallas.1} parent=0 // pred_check
    _
  $region7: #{res_bottleneck_block_pallas.1} parent=0 // pred_check_branch
    %13 = sbr.rel (0) target = $region9
  $region8: #{res_bottleneck_block_pallas.1} parent=0 // pred_region
    _
  $region9: #{res_bottleneck_block_pallas.1} parent=0 // pred_fallthru
    _
  // Predicated region
  $region10: #{res_bottleneck_block_pallas.1} parent=0 // pred_check
    _
  $region11: #{res_bottleneck_block_pallas.1} parent=0 // pred_check_branch
    %15 = sbr.rel (0) target = $region13
  $region12: #{res_bottleneck_block_pallas.1} parent=0 // pred_region
    _
  $region13: #{res_bottleneck_block_pallas.1} parent=0 // pred_fallthru
    _
  // Predicated region
  $region14: #{res_bottleneck_block_pallas.1} parent=0 // pred_check
    _
  $region15: #{res_bottleneck_block_pallas.1} parent=0 // pred_check_branch
    %17 = sbr.rel (0) target = $region17
  $region16: #{res_bottleneck_block_pallas.1} parent=0 // pred_region
    _
  $region17: #{res_bottleneck_block_pallas.1} parent=0 // pred_fallthru
    _
  // Predicated region
  $region18: #{res_bottleneck_block_pallas.1} parent=0 // pred_check
    _
  $region19: #{res_bottleneck_block_pallas.1} parent=0 // pred_check_branch
    %19 = sbr.rel (0) target = $region21
  $region20: #{res_bottleneck_block_pallas.1} parent=0 // pred_region
    _
  $region21: #{res_bottleneck_block_pallas.1} parent=0 // pred_fallthru
    _
  %v21 = vld [vmem:[%s4] sm:$0xff]
  %v22 = vld [vmem:[%s0] sm:$0xff]
  %v23 = vld [vmem:[%s0 + $0x8] sm:$0xff]
  %v24 = vld [vmem:[%s0 + $0x10] sm:$0xff]
  %v25 = vld [vmem:[%s0 + $0x18] sm:$0xff]
  %v26 = vld [vmem:[%s0 + $0x20] sm:$0xff]
  %v27 = vld [vmem:[%s0 + $0x28] sm:$0xff]
  %v28 = vld [vmem:[%s0 + $0x30] sm:$0xff]
  %v29 = vld [vmem:[%s0 + $0x38] sm:$0xff]
  %v30 = vld [vmem:[%s0 + $0x40] sm:$0xff]
  %v31 = vld [vmem:[%s0 + $0x48] sm:$0xff]
  %v32 = vld [vmem:[%s0 + $0x50] sm:$0xff]
  %v33 = vld [vmem:[%s0 + $0x58] sm:$0xff]
  %v34 = vld [vmem:[%s0 + $0x60] sm:$0xff]
  %v35 = vld [vmem:[%s0 + $0x68] sm:$0xff]
  %v36 = vld [vmem:[%s0 + $0x70] sm:$0xff]
  %v37 = vld [vmem:[%s0 + $0x78] sm:$0xff]
  %v38 = vld [vmem:[%s0 + $0x80] sm:$0xff]
  %v39 = vld [vmem:[%s0 + $0x88] sm:$0xff]
  %v40 = vld [vmem:[%s0 + $0x90] sm:$0xff]
  %v41 = vld [vmem:[%s0 + $0x98] sm:$0xff]
  %v42 = vld [vmem:[%s0 + $0xa0] sm:$0xff]
  %v43 = vld [vmem:[%s0 + $0xa8] sm:$0xff]
  %v44 = vld [vmem:[%s0 + $0xb0] sm:$0xff]
  %v45 = vld [vmem:[%s0 + $0xb8] sm:$0xff]
  %v46 = vld [vmem:[%s0 + $0xc0] sm:$0xff]
  %v47 = vld [vmem:[%s0 + $0xc8] sm:$0xff]
  %v48 = vpack.c.bf16 %v23, %v22
  %v49 = vpack.c.bf16 %v25, %v24
  %v50 = vpack.c.bf16 %v27, %v26
  %v51 = vpack.c.bf16 %v29, %v28
  %v52 = vpack.c.bf16 %v31, %v30
  %v53 = vpack.c.bf16 %v33, %v32
  %v54 = vpack.c.bf16 %v35, %v34
  %v55 = vpack.c.bf16 %v37, %v36
  %v56 = vpack.c.bf16 %v39, %v38
  %v57 = vpack.c.bf16 %v41, %v40
  %v58 = vpack.c.bf16 %v43, %v42
  %v59 = vpack.c.bf16 %v45, %v44
  %v60 = vpack.c.bf16 %v47, %v46
  %v61 = vld [vmem:[%s1] sm:$0xf]
  %v62 = vld [vmem:[%s1 + $0x4] sm:$0xf]
  %v63 = vld [vmem:[%s1 + $0x8] sm:$0xf]
  %v64 = vld [vmem:[%s1 + $0xc] sm:$0xf]
  %v65 = vld [vmem:[%s1 + $0x10] sm:$0xf]
  %v66 = vld [vmem:[%s1 + $0x14] sm:$0xf]
  %v67 = vld [vmem:[%s1 + $0x18] sm:$0xf]
  %v68 = vld [vmem:[%s1 + $0x1c] sm:$0xf]
  %v69 = vld [vmem:[%s1 + $0x20] sm:$0xf]
  %v70 = vld [vmem:[%s1 + $0x24] sm:$0xf]
  %v71 = vld [vmem:[%s1 + $0x28] sm:$0xf]
  %v72 = vld [vmem:[%s1 + $0x2c] sm:$0xf]
  %v73 = vld [vmem:[%s1 + $0x30] sm:$0xf]
  %v74 = vld [vmem:[%s1 + $0x34] sm:$0xf]
  %v75 = vld [vmem:[%s1 + $0x38] sm:$0xf]
  %v76 = vld [vmem:[%s1 + $0x3c] sm:$0xf]
  %v77 = vlaneseq
  %v78 = vshrl.u32 %v77, 7
  %v79 = vsub.s32 0, %v78
  %v80 = vrot.slane %v21, %v79
  %v97 = vunpack.c.l.b16 %v61
  %v98 = vunpack.c.l.b16 %v62
  %v99 = vunpack.c.l.b16 %v63
  %v100 = vunpack.c.l.b16 %v64
  %v101 = vunpack.c.l.b16 %v65
  %v102 = vunpack.c.l.b16 %v66
  %v103 = vunpack.c.l.b16 %v67
  %v104 = vunpack.c.l.b16 %v68
  %v105 = vunpack.c.l.b16 %v69
  %v106 = vunpack.c.l.b16 %v70
  %v107 = vunpack.c.l.b16 %v71
  %v108 = vunpack.c.l.b16 %v72
  %v109 = vunpack.c.l.b16 %v73
  %v110 = vunpack.c.l.b16 %v74
  %v111 = vunpack.c.l.b16 %v75
  %v112 = vunpack.c.l.b16 %v76
  %v113 = vpack.c.b16 %v98, %v97
  %v114 = vpack.c.b16 %v100, %v99
  %v115 = vpack.c.b16 %v102, %v101
  %v116 = vpack.c.b16 %v104, %v103
  %v117 = vpack.c.b16 %v106, %v105
  %v118 = vpack.c.b16 %v108, %v107
  %v119 = vpack.c.b16 %v110, %v109
  %v120 = vpack.c.b16 %v112, %v111
  %129 = vmatprep.subr.bf16.mxu0 0
  %130 = vmatpush1.bf16.msra.mxu0 %v113
  %131 = vmatprep.subr.bf16.mxu0 0
  %132 = vmatpush1.bf16.msra.mxu0 %v114
  %133 = vmatprep.subr.bf16.mxu0 0
  %134 = vmatpush1.bf16.msra.mxu0 %v115
  %135 = vmatprep.subr.bf16.mxu0 0
  %136 = vmatpush1.bf16.msra.mxu0 %v116
  %137 = vmatprep.subr.bf16.mxu0 0
  %138 = vmatpush1.bf16.msra.mxu0 %v117
  %139 = vmatprep.subr.bf16.mxu0 0
  %140 = vmatpush1.bf16.msra.mxu0 %v118
  %141 = vmatprep.subr.bf16.mxu0 0
  %142 = vmatpush1.bf16.msra.mxu0 %v119
  %143 = vmatprep.subr.bf16.mxu0 0
  %144 = vmatpush1.bf16.msra.mxu0 %v120
  %145 = vmatprep.subr.bf16.mxu0 0
  %146 = vmatpush1.bf16.msra.mxu0 0
  %147 = vmatprep.subr.bf16.mxu0 0
  %148 = vmatpush1.bf16.msra.mxu0 0
  %149 = vmatprep.subr.bf16.mxu0 0
  %150 = vmatpush1.bf16.msra.mxu0 0
  %151 = vmatprep.subr.bf16.mxu0 0
  %152 = vmatpush1.bf16.msra.mxu0 0
  %153 = vmatprep.subr.bf16.mxu0 0
  %154 = vmatpush1.bf16.msra.mxu0 0
  %155 = vmatprep.subr.bf16.mxu0 0
  %156 = vmatpush1.bf16.msra.mxu0 0
  %157 = vmatprep.subr.bf16.mxu0 0
  %158 = vmatpush1.bf16.msra.mxu0 0
  %159 = vmatprep.subr.bf16.mxu0 0
  %160 = vmatpush1.bf16.msra.mxu0 0
  %161 = vmatprep.mubr.bf16.mxu0 0
  %162 = vmatmul.mubr.bf16.gmra.mrb[0].mxu0 %v48
  %v163 = vpop.f32.mrb[0].mxu0
  %v164 = vadd.f32 %v80, %v163
  %v165 = vpop.f32.mrb[0].mxu0
  %v166 = vpop.f32.mrb[0].mxu0
  %v167 = vadd.f32 %v80, %v166
  %v168 = vpop.f32.mrb[0].mxu0
  %169 = vmatprep.mubr.bf16.mxu0 0
  %170 = vmatmul.mubr.bf16.gmra.mrb[0].mxu0 %v49
  %v171 = vpop.f32.mrb[0].mxu0
  %v172 = vadd.f32 %v80, %v171
  %v173 = vpop.f32.mrb[0].mxu0
  %v174 = vpop.f32.mrb[0].mxu0
  %v175 = vadd.f32 %v80, %v174
  %v176 = vpop.f32.mrb[0].mxu0
  %177 = vmatprep.mubr.bf16.mxu0 0
  %178 = vmatmul.mubr.bf16.gmra.mrb[0].mxu0 %v50
  %v179 = vpop.f32.mrb[0].mxu0
  %v180 = vadd.f32 %v80, %v179
  %v181 = vpop.f32.mrb[0].mxu0
  %v182 = vpop.f32.mrb[0].mxu0
  %v183 = vadd.f32 %v80, %v182
  %v184 = vpop.f32.mrb[0].mxu0
  %185 = vmatprep.mubr.bf16.mxu0 0
  %186 = vmatmul.mubr.bf16.gmra.mrb[0].mxu0 %v51
  %v187 = vpop.f32.mrb[0].mxu0
  %v188 = vadd.f32 %v80, %v187
  %v189 = vpop.f32.mrb[0].mxu0
  %v190 = vpop.f32.mrb[0].mxu0
  %v191 = vadd.f32 %v80, %v190
  %v192 = vpop.f32.mrb[0].mxu0
  %193 = vmatprep.mubr.bf16.mxu0 0
  %194 = vmatmul.mubr.bf16.gmra.mrb[0].mxu0 %v52
  %v195 = vpop.f32.mrb[0].mxu0
  %v196 = vadd.f32 %v80, %v195
  %v197 = vpop.f32.mrb[0].mxu0
  %v198 = vpop.f32.mrb[0].mxu0
  %v199 = vadd.f32 %v80, %v198
  %v200 = vpop.f32.mrb[0].mxu0
  %201 = vmatprep.mubr.bf16.mxu0 0
  %202 = vmatmul.mubr.bf16.gmra.mrb[0].mxu0 %v53
  %v203 = vpop.f32.mrb[0].mxu0
  %v204 = vadd.f32 %v80, %v203
  %v205 = vpop.f32.mrb[0].mxu0
  %v206 = vpop.f32.mrb[0].mxu0
  %v207 = vadd.f32 %v80, %v206
  %v208 = vpop.f32.mrb[0].mxu0
  %209 = vmatprep.mubr.bf16.mxu0 0
  %210 = vmatmul.mubr.bf16.gmra.mrb[0].mxu0 %v54
  %v211 = vpop.f32.mrb[0].mxu0
  %v212 = vadd.f32 %v80, %v211
  %v213 = vpop.f32.mrb[0].mxu0
  %v214 = vpop.f32.mrb[0].mxu0
  %v215 = vadd.f32 %v80, %v214
  %v216 = vpop.f32.mrb[0].mxu0
  %217 = vmatprep.mubr.bf16.mxu0 0
  %218 = vmatmul.mubr.bf16.gmra.mrb[0].mxu0 %v55
  %v219 = vpop.f32.mrb[0].mxu0
  %v220 = vadd.f32 %v80, %v219
  %v221 = vpop.f32.mrb[0].mxu0
  %v222 = vpop.f32.mrb[0].mxu0
  %v223 = vadd.f32 %v80, %v222
  %v224 = vpop.f32.mrb[0].mxu0
  %225 = vmatprep.mubr.bf16.mxu0 0
  %226 = vmatmul.mubr.bf16.gmra.mrb[0].mxu0 %v56
  %v227 = vpop.f32.mrb[0].mxu0
  %v228 = vadd.f32 %v80, %v227
  %v229 = vpop.f32.mrb[0].mxu0
  %v230 = vpop.f32.mrb[0].mxu0
  %v231 = vadd.f32 %v80, %v230
  %v232 = vpop.f32.mrb[0].mxu0
  %233 = vmatprep.mubr.bf16.mxu0 0
  %234 = vmatmul.mubr.bf16.gmra.mrb[0].mxu0 %v57
  %v235 = vpop.f32.mrb[0].mxu0
  %v236 = vadd.f32 %v80, %v235
  %v237 = vpop.f32.mrb[0].mxu0
  %v238 = vpop.f32.mrb[0].mxu0
  %v239 = vadd.f32 %v80, %v238
  %v240 = vpop.f32.mrb[0].mxu0
  %241 = vmatprep.mubr.bf16.mxu0 0
  %242 = vmatmul.mubr.bf16.gmra.mrb[0].mxu0 %v58
  %v243 = vpop.f32.mrb[0].mxu0
  %v244 = vadd.f32 %v80, %v243
  %v245 = vpop.f32.mrb[0].mxu0
  %v246 = vpop.f32.mrb[0].mxu0
  %v247 = vadd.f32 %v80, %v246
  %v248 = vpop.f32.mrb[0].mxu0
  %249 = vmatprep.mubr.bf16.mxu0 0
  %250 = vmatmul.mubr.bf16.gmra.mrb[0].mxu0 %v59
  %v251 = vpop.f32.mrb[0].mxu0
  %v252 = vadd.f32 %v80, %v251
  %v253 = vpop.f32.mrb[0].mxu0
  %v254 = vpop.f32.mrb[0].mxu0
  %v255 = vadd.f32 %v80, %v254
  %v256 = vpop.f32.mrb[0].mxu0
  %257 = vmatprep.mubr.bf16.mxu0 0
  %258 = vmatmul.mubr.bf16.gmra.mrb[0].mxu0 %v60
  %v259 = vpop.f32.mrb[0].mxu0
  %v260 = vadd.f32 %v80, %v259
  %v261 = vpop.f32.mrb[0].mxu0
  %v262 = vpop.f32.mrb[0].mxu0
  %v263 = vadd.f32 %v80, %v262
  %v264 = vpop.f32.mrb[0].mxu0
  %265 = vdwg.mxu0
  %vm266 = vcmp.ge.f32.partialorder %v164, 0.0
  %vm267 = vcmp.ge.f32.partialorder %v167, 0.0
  %vm268 = vcmp.ge.f32.partialorder %v172, 0.0
  %vm269 = vcmp.ge.f32.partialorder %v175, 0.0
  %vm270 = vcmp.ge.f32.partialorder %v180, 0.0
  %vm271 = vcmp.ge.f32.partialorder %v183, 0.0
  %vm272 = vcmp.ge.f32.partialorder %v188, 0.0
  %vm273 = vcmp.ge.f32.partialorder %v191, 0.0
  %vm274 = vcmp.ge.f32.partialorder %v196, 0.0
  %vm275 = vcmp.ge.f32.partialorder %v199, 0.0
  %vm276 = vcmp.ge.f32.partialorder %v204, 0.0
  %vm277 = vcmp.ge.f32.partialorder %v207, 0.0
  %vm278 = vcmp.ge.f32.partialorder %v212, 0.0
  %vm279 = vcmp.ge.f32.partialorder %v215, 0.0
  %vm280 = vcmp.ge.f32.partialorder %v220, 0.0
  %vm281 = vcmp.ge.f32.partialorder %v223, 0.0
  %vm282 = vcmp.ge.f32.partialorder %v228, 0.0
  %vm283 = vcmp.ge.f32.partialorder %v231, 0.0
  %vm284 = vcmp.ge.f32.partialorder %v236, 0.0
  %vm285 = vcmp.ge.f32.partialorder %v239, 0.0
  %vm286 = vcmp.ge.f32.partialorder %v244, 0.0
  %vm287 = vcmp.ge.f32.partialorder %v247, 0.0
  %vm288 = vcmp.ge.f32.partialorder %v252, 0.0
  %vm289 = vcmp.ge.f32.partialorder %v255, 0.0
  %vm290 = vcmp.ge.f32.partialorder %v260, 0.0
  %vm291 = vcmp.ge.f32.partialorder %v263, 0.0
  %v292 = vmul.f32 %v164, 0.2
  %v293 = vmul.f32 %v167, 0.2
  %v294 = vmul.f32 %v172, 0.2
  %v295 = vmul.f32 %v175, 0.2
  %v296 = vmul.f32 %v180, 0.2
  %v297 = vmul.f32 %v183, 0.2
  %v298 = vmul.f32 %v188, 0.2
  %v299 = vmul.f32 %v191, 0.2
  %v300 = vmul.f32 %v196, 0.2
  %v301 = vmul.f32 %v199, 0.2
  %v302 = vmul.f32 %v204, 0.2
  %v303 = vmul.f32 %v207, 0.2
  %v304 = vmul.f32 %v212, 0.2
  %v305 = vmul.f32 %v215, 0.2
  %v306 = vmul.f32 %v220, 0.2
  %v307 = vmul.f32 %v223, 0.2
  %v308 = vmul.f32 %v228, 0.2
  %v309 = vmul.f32 %v231, 0.2
  %v310 = vmul.f32 %v236, 0.2
  %v311 = vmul.f32 %v239, 0.2
  %v312 = vmul.f32 %v244, 0.2
  %v313 = vmul.f32 %v247, 0.2
  %v314 = vmul.f32 %v252, 0.2
  %v315 = vmul.f32 %v255, 0.2
  %v316 = vmul.f32 %v260, 0.2
  %v317 = vmul.f32 %v263, 0.2
  %v318 = vsel %vm266, %v164, %v292
  %v319 = vsel %vm267, %v167, %v293
  %v320 = vsel %vm268, %v172, %v294
  %v321 = vsel %vm269, %v175, %v295
  %v322 = vsel %vm270, %v180, %v296
  %v323 = vsel %vm271, %v183, %v297
  %v324 = vsel %vm272, %v188, %v298
  %v325 = vsel %vm273, %v191, %v299
  %v326 = vsel %vm274, %v196, %v300
  %v327 = vsel %vm275, %v199, %v301
  %v328 = vsel %vm276, %v204, %v302
  %v329 = vsel %vm277, %v207, %v303
  %v330 = vsel %vm278, %v212, %v304
  %v331 = vsel %vm279, %v215, %v305
  %v332 = vsel %vm280, %v220, %v306
  %v333 = vsel %vm281, %v223, %v307
  %v334 = vsel %vm282, %v228, %v308
  %v335 = vsel %vm283, %v231, %v309
  %v336 = vsel %vm284, %v236, %v310
  %v337 = vsel %vm285, %v239, %v311
  %v338 = vsel %vm286, %v244, %v312
  %v339 = vsel %vm287, %v247, %v313
  %v340 = vsel %vm288, %v252, %v314
  %v341 = vsel %vm289, %v255, %v315
  %v342 = vsel %vm290, %v260, %v316
  %v343 = vsel %vm291, %v263, %v317
  %v344 = vlaneseq
  %v345 = vshrl.u32 %v344, 7
  %v346 = vsub.s32 1, %v345
  %v347 = vrot.slane %v21, %v346
  %v348 = vmul.f32 %v318, %v347
  %v349 = vmul.f32 %v319, %v347
  %v350 = vmul.f32 %v320, %v347
  %v351 = vmul.f32 %v321, %v347
  %v352 = vmul.f32 %v322, %v347
  %v353 = vmul.f32 %v323, %v347
  %v354 = vmul.f32 %v324, %v347
  %v355 = vmul.f32 %v325, %v347
  %v356 = vmul.f32 %v326, %v347
  %v357 = vmul.f32 %v327, %v347
  %v358 = vmul.f32 %v328, %v347
  %v359 = vmul.f32 %v329, %v347
  %v360 = vmul.f32 %v330, %v347
  %v361 = vmul.f32 %v331, %v347
  %v362 = vmul.f32 %v332, %v347
  %v363 = vmul.f32 %v333, %v347
  %v364 = vmul.f32 %v334, %v347
  %v365 = vmul.f32 %v335, %v347
  %v366 = vmul.f32 %v336, %v347
  %v367 = vmul.f32 %v337, %v347
  %v368 = vmul.f32 %v338, %v347
  %v369 = vmul.f32 %v339, %v347
  %v370 = vmul.f32 %v340, %v347
  %v371 = vmul.f32 %v341, %v347
  %v372 = vmul.f32 %v342, %v347
  %v373 = vmul.f32 %v343, %v347
  %v374 = vlaneseq
  %v375 = vshrl.u32 %v374, 7
  %v376 = vsub.s32 2, %v375
  %v377 = vrot.slane %v21, %v376
  %v378 = vadd.f32 %v348, %v377
  %v379 = vadd.f32 %v349, %v377
  %v380 = vadd.f32 %v350, %v377
  %v381 = vadd.f32 %v351, %v377
  %v382 = vadd.f32 %v352, %v377
  %v383 = vadd.f32 %v353, %v377
  %v384 = vadd.f32 %v354, %v377
  %v385 = vadd.f32 %v355, %v377
  %v386 = vadd.f32 %v356, %v377
  %v387 = vadd.f32 %v357, %v377
  %v388 = vadd.f32 %v358, %v377
  %v389 = vadd.f32 %v359, %v377
  %v390 = vadd.f32 %v360, %v377
  %v391 = vadd.f32 %v361, %v377
  %v392 = vadd.f32 %v362, %v377
  %v393 = vadd.f32 %v363, %v377
  %v394 = vadd.f32 %v364, %v377
  %v395 = vadd.f32 %v365, %v377
  %v396 = vadd.f32 %v366, %v377
  %v397 = vadd.f32 %v367, %v377
  %v398 = vadd.f32 %v368, %v377
  %v399 = vadd.f32 %v369, %v377
  %v400 = vadd.f32 %v370, %v377
  %v401 = vadd.f32 %v371, %v377
  %v402 = vadd.f32 %v372, %v377
  %v403 = vadd.f32 %v373, %v377
  %v404 = vlaneseq
  %v405 = vshrl.u32 %v404, 7
  %v406 = vadd.s32 %v405, 8
  %v407 = vadd.s32 %v405, 16
  %v408 = vadd.s32 %v405, 24
  %v409 = vadd.s32 %v405, 32
  %v410 = vadd.s32 %v405, 40
  %v411 = vadd.s32 %v405, 48
  %v412 = vadd.s32 %v405, 56
  %v413 = vadd.s32 %v405, 64
  %v414 = vadd.s32 %v405, 72
  %v415 = vadd.s32 %v405, 80
  %v416 = vadd.s32 %v405, 88
  %v417 = vadd.s32 %v405, 96
  %v418 = vadd.s32 %v405, 104
  %v419 = vadd.s32 %v405, 112
  %v420 = vadd.s32 %v405, 120
  %v421 = vadd.s32 %v405, 128
  %v422 = vadd.s32 %v405, 136
  %v423 = vadd.s32 %v405, 144
  %v424 = vadd.s32 %v405, 152
  %v425 = vadd.s32 %v405, 160
  %v426 = vadd.s32 %v405, 168
  %v427 = vadd.s32 %v405, 176
  %v428 = vadd.s32 %v405, 184
  %v429 = vadd.s32 %v405, 192
  %v430 = vadd.s32 %v405, 200
  %vm431 = vcmp.lt.s32.totalorder %v405, 100
  %vm432 = vcmp.lt.s32.totalorder %v406, 100
  %vm433 = vcmp.lt.s32.totalorder %v407, 100
  %vm434 = vcmp.lt.s32.totalorder %v408, 100
  %vm435 = vcmp.lt.s32.totalorder %v409, 100
  %vm436 = vcmp.lt.s32.totalorder %v410, 100
  %vm437 = vcmp.lt.s32.totalorder %v411, 100
  %vm438 = vcmp.lt.s32.totalorder %v412, 100
  %vm439 = vcmp.lt.s32.totalorder %v413, 100
  %vm440 = vcmp.lt.s32.totalorder %v414, 100
  %vm441 = vcmp.lt.s32.totalorder %v415, 100
  %vm442 = vcmp.lt.s32.totalorder %v416, 100
  %vm443 = vcmp.lt.s32.totalorder %v417, 100
  %vm444 = vcmp.lt.s32.totalorder %v418, 100
  %vm445 = vcmp.lt.s32.totalorder %v419, 100
  %vm446 = vcmp.lt.s32.totalorder %v420, 100
  %vm447 = vcmp.lt.s32.totalorder %v421, 100
  %vm448 = vcmp.lt.s32.totalorder %v422, 100
  %vm449 = vcmp.lt.s32.totalorder %v423, 100
  %vm450 = vcmp.lt.s32.totalorder %v424, 100
  %vm451 = vcmp.lt.s32.totalorder %v425, 100
  %vm452 = vcmp.lt.s32.totalorder %v426, 100
  %vm453 = vcmp.lt.s32.totalorder %v427, 100
  %vm454 = vcmp.lt.s32.totalorder %v428, 100
  %vm455 = vcmp.lt.s32.totalorder %v429, 100
  %vm456 = vcmp.lt.s32.totalorder %v430, 100
  %vm457 = vcmp.ge.s32.totalorder %v405, 104
  %vm458 = vcmp.ge.s32.totalorder %v406, 104
  %vm459 = vcmp.ge.s32.totalorder %v407, 104
  %vm460 = vcmp.ge.s32.totalorder %v408, 104
  %vm461 = vcmp.ge.s32.totalorder %v409, 104
  %vm462 = vcmp.ge.s32.totalorder %v410, 104
  %vm463 = vcmp.ge.s32.totalorder %v411, 104
  %vm464 = vcmp.ge.s32.totalorder %v412, 104
  %vm465 = vcmp.ge.s32.totalorder %v413, 104
  %vm466 = vcmp.ge.s32.totalorder %v414, 104
  %vm467 = vcmp.ge.s32.totalorder %v415, 104
  %vm468 = vcmp.ge.s32.totalorder %v416, 104
  %vm469 = vcmp.ge.s32.totalorder %v417, 104
  %vm470 = vcmp.ge.s32.totalorder %v418, 104
  %vm471 = vcmp.ge.s32.totalorder %v419, 104
  %vm472 = vcmp.ge.s32.totalorder %v420, 104
  %vm473 = vcmp.ge.s32.totalorder %v421, 104
  %vm474 = vcmp.ge.s32.totalorder %v422, 104
  %vm475 = vcmp.ge.s32.totalorder %v423, 104
  %vm476 = vcmp.ge.s32.totalorder %v424, 104
  %vm477 = vcmp.ge.s32.totalorder %v425, 104
  %vm478 = vcmp.ge.s32.totalorder %v426, 104
  %vm479 = vcmp.ge.s32.totalorder %v427, 104
  %vm480 = vcmp.ge.s32.totalorder %v428, 104
  %vm481 = vcmp.ge.s32.totalorder %v429, 104
  %vm482 = vcmp.ge.s32.totalorder %v430, 104
  %vm483 = vcmp.lt.s32.totalorder %v405, 204
  %vm484 = vcmp.lt.s32.totalorder %v406, 204
  %vm485 = vcmp.lt.s32.totalorder %v407, 204
  %vm486 = vcmp.lt.s32.totalorder %v408, 204
  %vm487 = vcmp.lt.s32.totalorder %v409, 204
  %vm488 = vcmp.lt.s32.totalorder %v410, 204
  %vm489 = vcmp.lt.s32.totalorder %v411, 204
  %vm490 = vcmp.lt.s32.totalorder %v412, 204
  %vm491 = vcmp.lt.s32.totalorder %v413, 204
  %vm492 = vcmp.lt.s32.totalorder %v414, 204
  %vm493 = vcmp.lt.s32.totalorder %v415, 204
  %vm494 = vcmp.lt.s32.totalorder %v416, 204
  %vm495 = vcmp.lt.s32.totalorder %v417, 204
  %vm496 = vcmp.lt.s32.totalorder %v418, 204
  %vm497 = vcmp.lt.s32.totalorder %v419, 204
  %vm498 = vcmp.lt.s32.totalorder %v420, 204
  %vm499 = vcmp.lt.s32.totalorder %v421, 204
  %vm500 = vcmp.lt.s32.totalorder %v422, 204
  %vm501 = vcmp.lt.s32.totalorder %v423, 204
  %vm502 = vcmp.lt.s32.totalorder %v424, 204
  %vm503 = vcmp.lt.s32.totalorder %v425, 204
  %vm504 = vcmp.lt.s32.totalorder %v426, 204
  %vm505 = vcmp.lt.s32.totalorder %v427, 204
  %vm506 = vcmp.lt.s32.totalorder %v428, 204
  %vm507 = vcmp.lt.s32.totalorder %v429, 204
  %vm508 = vcmp.lt.s32.totalorder %v430, 204
  %vm509 = vmand %vm457, %vm483
  %vm510 = vmand %vm458, %vm484
  %vm511 = vmand %vm459, %vm485
  %vm512 = vmand %vm460, %vm486
  %vm513 = vmand %vm461, %vm487
  %vm514 = vmand %vm462, %vm488
  %vm515 = vmand %vm463, %vm489
  %vm516 = vmand %vm464, %vm490
  %vm517 = vmand %vm465, %vm491
  %vm518 = vmand %vm466, %vm492
  %vm519 = vmand %vm467, %vm493
  %vm520 = vmand %vm468, %vm494
  %vm521 = vmand %vm469, %vm495
  %vm522 = vmand %vm470, %vm496
  %vm523 = vmand %vm471, %vm497
  %vm524 = vmand %vm472, %vm498
  %vm525 = vmand %vm473, %vm499
  %vm526 = vmand %vm474, %vm500
  %vm527 = vmand %vm475, %vm501
  %vm528 = vmand %vm476, %vm502
  %vm529 = vmand %vm477, %vm503
  %vm530 = vmand %vm478, %vm504
  %vm531 = vmand %vm479, %vm505
  %vm532 = vmand %vm480, %vm506
  %vm533 = vmand %vm481, %vm507
  %vm534 = vmand %vm482, %vm508
  %vm535 = vmor %vm431, %vm509
  %vm536 = vmor %vm432, %vm510
  %vm537 = vmor %vm433, %vm511
  %vm538 = vmor %vm434, %vm512
  %vm539 = vmor %vm435, %vm513
  %vm540 = vmor %vm436, %vm514
  %vm541 = vmor %vm437, %vm515
  %vm542 = vmor %vm438, %vm516
  %vm543 = vmor %vm439, %vm517
  %vm544 = vmor %vm440, %vm518
  %vm545 = vmor %vm441, %vm519
  %vm546 = vmor %vm442, %vm520
  %vm547 = vmor %vm443, %vm521
  %vm548 = vmor %vm444, %vm522
  %vm549 = vmor %vm445, %vm523
  %vm550 = vmor %vm446, %vm524
  %vm551 = vmor %vm447, %vm525
  %vm552 = vmor %vm448, %vm526
  %vm553 = vmor %vm449, %vm527
  %vm554 = vmor %vm450, %vm528
  %vm555 = vmor %vm451, %vm529
  %vm556 = vmor %vm452, %vm530
  %vm557 = vmor %vm453, %vm531
  %vm558 = vmor %vm454, %vm532
  %vm559 = vmor %vm455, %vm533
  %vm560 = vmor %vm456, %vm534
  %v561 = vsel %vm535, 1, 0
  %v562 = vsel %vm536, 1, 0
  %v563 = vsel %vm537, 1, 0
  %v564 = vsel %vm538, 1, 0
  %v565 = vsel %vm539, 1, 0
  %v566 = vsel %vm540, 1, 0
  %v567 = vsel %vm541, 1, 0
  %v568 = vsel %vm542, 1, 0
  %v569 = vsel %vm543, 1, 0
  %v570 = vsel %vm544, 1, 0
  %v571 = vsel %vm545, 1, 0
  %v572 = vsel %vm546, 1, 0
  %v573 = vsel %vm547, 1, 0
  %v574 = vsel %vm548, 1, 0
  %v575 = vsel %vm549, 1, 0
  %v576 = vsel %vm550, 1, 0
  %v577 = vsel %vm551, 1, 0
  %v578 = vsel %vm552, 1, 0
  %v579 = vsel %vm553, 1, 0
  %v580 = vsel %vm554, 1, 0
  %v581 = vsel %vm555, 1, 0
  %v582 = vsel %vm556, 1, 0
  %v583 = vsel %vm557, 1, 0
  %v584 = vsel %vm558, 1, 0
  %v585 = vsel %vm559, 1, 0
  %v586 = vsel %vm560, 1, 0
  %vm587 = vcmp.eq.s32.totalorder %v561, 1
  %vm588 = vcmp.eq.s32.totalorder %v562, 1
  %vm589 = vcmp.eq.s32.totalorder %v563, 1
  %vm590 = vcmp.eq.s32.totalorder %v564, 1
  %vm591 = vcmp.eq.s32.totalorder %v565, 1
  %vm592 = vcmp.eq.s32.totalorder %v566, 1
  %vm593 = vcmp.eq.s32.totalorder %v567, 1
  %vm594 = vcmp.eq.s32.totalorder %v568, 1
  %vm595 = vcmp.eq.s32.totalorder %v569, 1
  %vm596 = vcmp.eq.s32.totalorder %v570, 1
  %vm597 = vcmp.eq.s32.totalorder %v571, 1
  %vm598 = vcmp.eq.s32.totalorder %v572, 1
  %vm599 = vcmp.eq.s32.totalorder %v573, 1
  %vm600 = vcmp.eq.s32.totalorder %v574, 1
  %vm601 = vcmp.eq.s32.totalorder %v575, 1
  %vm602 = vcmp.eq.s32.totalorder %v576, 1
  %vm603 = vcmp.eq.s32.totalorder %v577, 1
  %vm604 = vcmp.eq.s32.totalorder %v578, 1
  %vm605 = vcmp.eq.s32.totalorder %v579, 1
  %vm606 = vcmp.eq.s32.totalorder %v580, 1
  %vm607 = vcmp.eq.s32.totalorder %v581, 1
  %vm608 = vcmp.eq.s32.totalorder %v582, 1
  %vm609 = vcmp.eq.s32.totalorder %v583, 1
  %vm610 = vcmp.eq.s32.totalorder %v584, 1
  %vm611 = vcmp.eq.s32.totalorder %v585, 1
  %vm612 = vcmp.eq.s32.totalorder %v586, 1
  %v613 = vsel %vm587, %v378, 0.0
  %v614 = vsel %vm588, %v379, 0.0
  %v615 = vsel %vm589, %v380, 0.0
  %v616 = vsel %vm590, %v381, 0.0
  %v617 = vsel %vm591, %v382, 0.0
  %v618 = vsel %vm592, %v383, 0.0
  %v619 = vsel %vm593, %v384, 0.0
  %v620 = vsel %vm594, %v385, 0.0
  %v621 = vsel %vm595, %v386, 0.0
  %v622 = vsel %vm596, %v387, 0.0
  %v623 = vsel %vm597, %v388, 0.0
  %v624 = vsel %vm598, %v389, 0.0
  %v625 = vsel %vm599, %v390, 0.0
  %v626 = vsel %vm600, %v391, 0.0
  %v627 = vsel %vm601, %v392, 0.0
  %v628 = vsel %vm602, %v393, 0.0
  %v629 = vsel %vm603, %v394, 0.0
  %v630 = vsel %vm604, %v395, 0.0
  %v631 = vsel %vm605, %v396, 0.0
  %v632 = vsel %vm606, %v397, 0.0
  %v633 = vsel %vm607, %v398, 0.0
  %v634 = vsel %vm608, %v399, 0.0
  %v635 = vsel %vm609, %v400, 0.0
  %v636 = vsel %vm610, %v401, 0.0
  %v637 = vsel %vm611, %v402, 0.0
  %v638 = vsel %vm612, %v403, 0.0
  %v639 = vpack.c.bf16 %v614, %v613
  %v640 = vpack.c.bf16 %v616, %v615
  %v641 = vpack.c.bf16 %v618, %v617
  %v642 = vpack.c.bf16 %v620, %v619
  %v643 = vpack.c.bf16 %v622, %v621
  %v644 = vpack.c.bf16 %v624, %v623
  %v645 = vpack.c.bf16 %v626, %v625
  %v646 = vpack.c.bf16 %v628, %v627
  %v647 = vpack.c.bf16 %v630, %v629
  %v648 = vpack.c.bf16 %v632, %v631
  %v649 = vpack.c.bf16 %v634, %v633
  %v650 = vpack.c.bf16 %v636, %v635
  %v651 = vpack.c.bf16 %v638, %v637
  %v652 = vld [vmem:[%s2] sm:$0xff]
  %v653 = vld [vmem:[%s2 + $0x8] sm:$0xf]
  %v654 = vld [vmem:[%s2 + $0xc] sm:$0xff]
  %v655 = vld [vmem:[%s2 + $0x14] sm:$0xf]
  %v656 = vld [vmem:[%s2 + $0x18] sm:$0xff]
  %v657 = vld [vmem:[%s2 + $0x20] sm:$0xf]
  %v658 = vld [vmem:[%s2 + $0x24] sm:$0xff]
  %v659 = vld [vmem:[%s2 + $0x2c] sm:$0xf]
  %v660 = vld [vmem:[%s2 + $0x30] sm:$0xff]
  %v661 = vld [vmem:[%s2 + $0x38] sm:$0xf]
  %v662 = vld [vmem:[%s2 + $0x3c] sm:$0xff]
  %v663 = vld [vmem:[%s2 + $0x44] sm:$0xf]
  %v664 = vld [vmem:[%s2 + $0x48] sm:$0xff]
  %v665 = vld [vmem:[%s2 + $0x50] sm:$0xf]
  %v666 = vld [vmem:[%s2 + $0x54] sm:$0xff]
  %v667 = vld [vmem:[%s2 + $0x5c] sm:$0xf]
  %v668 = vld [vmem:[%s2 + $0x60] sm:$0xff]
  %v669 = vld [vmem:[%s2 + $0x68] sm:$0xf]
  %v670 = vld [vmem:[%s2 + $0x6c] sm:$0xff]
  %v671 = vld [vmem:[%s2 + $0x74] sm:$0xf]
  %v672 = vld [vmem:[%s2 + $0x78] sm:$0xff]
  %v673 = vld [vmem:[%s2 + $0x80] sm:$0xf]
  %v674 = vld [vmem:[%s2 + $0x84] sm:$0xff]
  %v675 = vld [vmem:[%s2 + $0x8c] sm:$0xf]
  %v676 = vld [vmem:[%s2 + $0x90] sm:$0xff]
  %v677 = vld [vmem:[%s2 + $0x98] sm:$0xf]
  %v678 = vld [vmem:[%s2 + $0x9c] sm:$0xff]
  %v679 = vld [vmem:[%s2 + $0xa4] sm:$0xf]
  %v680 = vld [vmem:[%s2 + $0xa8] sm:$0xff]
  %v681 = vld [vmem:[%s2 + $0xb0] sm:$0xf]
  %v682 = vld [vmem:[%s2 + $0xb4] sm:$0xff]
  %v683 = vld [vmem:[%s2 + $0xbc] sm:$0xf]
  %v716 = vunpack.c.l.b16 %v652
  %v717 = vunpack.c.h.b16 %v652
  %v718 = vunpack.c.l.b16 %v653
  %v719 = vunpack.c.l.b16 %v654
  %v720 = vunpack.c.h.b16 %v654
  %v721 = vunpack.c.l.b16 %v655
  %v722 = vunpack.c.l.b16 %v656
  %v723 = vunpack.c.h.b16 %v656
  %v724 = vunpack.c.l.b16 %v657
  %v725 = vunpack.c.l.b16 %v658
  %v726 = vunpack.c.h.b16 %v658
  %v727 = vunpack.c.l.b16 %v659
  %v728 = vunpack.c.l.b16 %v660
  %v729 = vunpack.c.h.b16 %v660
  %v730 = vunpack.c.l.b16 %v661
  %v731 = vunpack.c.l.b16 %v662
  %v732 = vunpack.c.h.b16 %v662
  %v733 = vunpack.c.l.b16 %v663
  %v734 = vunpack.c.l.b16 %v664
  %v735 = vunpack.c.h.b16 %v664
  %v736 = vunpack.c.l.b16 %v665
  %v737 = vunpack.c.l.b16 %v666
  %v738 = vunpack.c.h.b16 %v666
  %v739 = vunpack.c.l.b16 %v667
  %v740 = vunpack.c.l.b16 %v668
  %v741 = vunpack.c.h.b16 %v668
  %v742 = vunpack.c.l.b16 %v669
  %v743 = vunpack.c.l.b16 %v670
  %v744 = vunpack.c.h.b16 %v670
  %v745 = vunpack.c.l.b16 %v671
  %v746 = vunpack.c.l.b16 %v672
  %v747 = vunpack.c.h.b16 %v672
  %v748 = vunpack.c.l.b16 %v673
  %v749 = vunpack.c.l.b16 %v674
  %v750 = vunpack.c.h.b16 %v674
  %v751 = vunpack.c.l.b16 %v675
  %v752 = vunpack.c.l.b16 %v676
  %v753 = vunpack.c.h.b16 %v676
  %v754 = vunpack.c.l.b16 %v677
  %v755 = vunpack.c.l.b16 %v678
  %v756 = vunpack.c.h.b16 %v678
  %v757 = vunpack.c.l.b16 %v679
  %v758 = vunpack.c.l.b16 %v680
  %v759 = vunpack.c.h.b16 %v680
  %v760 = vunpack.c.l.b16 %v681
  %v761 = vunpack.c.l.b16 %v682
  %v762 = vunpack.c.h.b16 %v682
  %v763 = vunpack.c.l.b16 %v683
  %v764 = vpack.c.b16 %v719, %v716
  %v765 = vpack.c.b16 %v720, %v717
  %v766 = vpack.c.b16 %v721, %v718
  %v767 = vpack.c.b16 %v725, %v722
  %v768 = vpack.c.b16 %v726, %v723
  %v769 = vpack.c.b16 %v727, %v724
  %v770 = vpack.c.b16 %v731, %v728
  %v771 = vpack.c.b16 %v732, %v729
  %v772 = vpack.c.b16 %v733, %v730
  %v773 = vpack.c.b16 %v737, %v734
  %v774 = vpack.c.b16 %v738, %v735
  %v775 = vpack.c.b16 %v739, %v736
  %v776 = vpack.c.b16 %v743, %v740
  %v777 = vpack.c.b16 %v744, %v741
  %v778 = vpack.c.b16 %v745, %v742
  %v779 = vpack.c.b16 %v749, %v746
  %v780 = vpack.c.b16 %v750, %v747
  %v781 = vpack.c.b16 %v751, %v748
  %v782 = vpack.c.b16 %v755, %v752
  %v783 = vpack.c.b16 %v756, %v753
  %v784 = vpack.c.b16 %v757, %v754
  %v785 = vpack.c.b16 %v761, %v758
  %v786 = vpack.c.b16 %v762, %v759
  %v787 = vpack.c.b16 %v763, %v760
  %812 = vmatprep.subr.bf16.mxu0 %v765
  %813 = vmatpush1.bf16.msra.mxu0 %v764
  %814 = vmatprep.subr.bf16.mxu0 %v768
  %815 = vmatpush1.bf16.msra.mxu0 %v767
  %816 = vmatprep.subr.bf16.mxu0 %v771
  %817 = vmatpush1.bf16.msra.mxu0 %v770
  %818 = vmatprep.subr.bf16.mxu0 %v774
  %819 = vmatpush1.bf16.msra.mxu0 %v773
  %820 = vmatprep.subr.bf16.mxu0 %v777
  %821 = vmatpush1.bf16.msra.mxu0 %v776
  %822 = vmatprep.subr.bf16.mxu0 %v780
  %823 = vmatpush1.bf16.msra.mxu0 %v779
  %824 = vmatprep.subr.bf16.mxu0 %v783
  %825 = vmatpush1.bf16.msra.mxu0 %v782
  %826 = vmatprep.subr.bf16.mxu0 %v786
  %827 = vmatpush1.bf16.msra.mxu0 %v785
  %828 = vmatprep.subr.bf16.mxu0 0
  %829 = vmatpush1.bf16.msra.mxu0 0
  %830 = vmatprep.subr.bf16.mxu0 0
  %831 = vmatpush1.bf16.msra.mxu0 0
  %832 = vmatprep.subr.bf16.mxu0 0
  %833 = vmatpush1.bf16.msra.mxu0 0
  %834 = vmatprep.subr.bf16.mxu0 0
  %835 = vmatpush1.bf16.msra.mxu0 0
  %836 = vmatprep.subr.bf16.mxu0 0
  %837 = vmatpush1.bf16.msra.mxu0 0
  %838 = vmatprep.subr.bf16.mxu0 0
  %839 = vmatpush1.bf16.msra.mxu0 0
  %840 = vmatprep.subr.bf16.mxu0 0
  %841 = vmatpush1.bf16.msra.mxu0 0
  %842 = vmatprep.subr.bf16.mxu0 0
  %843 = vmatpush1.bf16.msra.mxu0 0
  %844 = vmatprep.mubr.bf16.mxu0 0
  %845 = vmatmul.mubr.bf16.gmra.mrb[0].mxu0 %v639
  %v846 = vpop.f32.mrb[0].mxu0
  %v847 = vadd.f32 0.0, %v846
  %v848 = vpop.f32.mrb[0].mxu0
  %v849 = vadd.f32 0.0, %v848
  %v850 = vpop.f32.mrb[0].mxu0
  %v851 = vadd.f32 0.0, %v850
  %v852 = vpop.f32.mrb[0].mxu0
  %v853 = vadd.f32 0.0, %v852
  %854 = vmatprep.mubr.bf16.mxu0 0
  %855 = vmatmul.mubr.bf16.gmra.mrb[0].mxu0 %v640
  %v856 = vpop.f32.mrb[0].mxu0
  %v857 = vadd.f32 0.0, %v856
  %v858 = vpop.f32.mrb[0].mxu0
  %v859 = vadd.f32 0.0, %v858
  %v860 = vpop.f32.mrb[0].mxu0
  %v861 = vadd.f32 0.0, %v860
  %v862 = vpop.f32.mrb[0].mxu0
  %v863 = vadd.f32 0.0, %v862
  %864 = vmatprep.mubr.bf16.mxu0 0
  %865 = vmatmul.mubr.bf16.gmra.mrb[0].mxu0 %v641
  %v866 = vpop.f32.mrb[0].mxu0
  %v867 = vadd.f32 0.0, %v866
  %v868 = vpop.f32.mrb[0].mxu0
  %v869 = vadd.f32 0.0, %v868
  %v870 = vpop.f32.mrb[0].mxu0
  %v871 = vadd.f32 0.0, %v870
  %v872 = vpop.f32.mrb[0].mxu0
  %v873 = vadd.f32 0.0, %v872
  %874 = vmatprep.mubr.bf16.mxu0 0
  %875 = vmatmul.mubr.bf16.gmra.mrb[0].mxu0 %v642
  %v876 = vpop.f32.mrb[0].mxu0
  %v877 = vadd.f32 0.0, %v876
  %v878 = vpop.f32.mrb[0].mxu0
  %v879 = vadd.f32 0.0, %v878
  %v880 = vpop.f32.mrb[0].mxu0
  %v881 = vadd.f32 0.0, %v880
  %v882 = vpop.f32.mrb[0].mxu0
  %v883 = vadd.f32 0.0, %v882
  %884 = vmatprep.mubr.bf16.mxu0 0
  %885 = vmatmul.mubr.bf16.gmra.mrb[0].mxu0 %v643
  %v886 = vpop.f32.mrb[0].mxu0
  %v887 = vadd.f32 0.0, %v886
  %v888 = vpop.f32.mrb[0].mxu0
  %v889 = vadd.f32 0.0, %v888
  %v890 = vpop.f32.mrb[0].mxu0
  %v891 = vadd.f32 0.0, %v890
  %v892 = vpop.f32.mrb[0].mxu0
  %v893 = vadd.f32 0.0, %v892
  %894 = vmatprep.mubr.bf16.mxu0 0
  %895 = vmatmul.mubr.bf16.gmra.mrb[0].mxu0 %v644
  %v896 = vpop.f32.mrb[0].mxu0
  %v897 = vadd.f32 0.0, %v896
  %v898 = vpop.f32.mrb[0].mxu0
  %v899 = vadd.f32 0.0, %v898
  %v900 = vpop.f32.mrb[0].mxu0
  %v901 = vadd.f32 0.0, %v900
  %v902 = vpop.f32.mrb[0].mxu0
  %v903 = vadd.f32 0.0, %v902
  %904 = vmatprep.mubr.bf16.mxu0 0
  %905 = vmatmul.mubr.bf16.gmra.mrb[0].mxu0 %v645
  %v906 = vpop.f32.mrb[0].mxu0
  %v907 = vadd.f32 0.0, %v906
  %v908 = vpop.f32.mrb[0].mxu0
  %v909 = vadd.f32 0.0, %v908
  %v910 = vpop.f32.mrb[0].mxu0
  %v911 = vadd.f32 0.0, %v910
  %v912 = vpop.f32.mrb[0].mxu0
  %v913 = vadd.f32 0.0, %v912
  %914 = vmatprep.mubr.bf16.mxu0 0
  %915 = vmatmul.mubr.bf16.gmra.mrb[0].mxu0 %v646
  %v916 = vpop.f32.mrb[0].mxu0
  %v917 = vadd.f32 0.0, %v916
  %v918 = vpop.f32.mrb[0].mxu0
  %v919 = vadd.f32 0.0, %v918
  %v920 = vpop.f32.mrb[0].mxu0
  %v921 = vadd.f32 0.0, %v920
  %v922 = vpop.f32.mrb[0].mxu0
  %v923 = vadd.f32 0.0, %v922
  %924 = vmatprep.mubr.bf16.mxu0 0
  %925 = vmatmul.mubr.bf16.gmra.mrb[0].mxu0 %v647
  %v926 = vpop.f32.mrb[0].mxu0
  %v927 = vadd.f32 0.0, %v926
  %v928 = vpop.f32.mrb[0].mxu0
  %v929 = vadd.f32 0.0, %v928
  %v930 = vpop.f32.mrb[0].mxu0
  %v931 = vadd.f32 0.0, %v930
  %v932 = vpop.f32.mrb[0].mxu0
  %v933 = vadd.f32 0.0, %v932
  %934 = vmatprep.mubr.bf16.mxu0 0
  %935 = vmatmul.mubr.bf16.gmra.mrb[0].mxu0 %v648
  %v936 = vpop.f32.mrb[0].mxu0
  %v937 = vadd.f32 0.0, %v936
  %v938 = vpop.f32.mrb[0].mxu0
  %v939 = vadd.f32 0.0, %v938
  %v940 = vpop.f32.mrb[0].mxu0
  %v941 = vadd.f32 0.0, %v940
  %v942 = vpop.f32.mrb[0].mxu0
  %v943 = vadd.f32 0.0, %v942
  %944 = vmatprep.mubr.bf16.mxu0 0
  %945 = vmatmul.mubr.bf16.gmra.mrb[0].mxu0 %v649
  %v946 = vpop.f32.mrb[0].mxu0
  %v947 = vadd.f32 0.0, %v946
  %v948 = vpop.f32.mrb[0].mxu0
  %v949 = vadd.f32 0.0, %v948
  %v950 = vpop.f32.mrb[0].mxu0
  %v951 = vadd.f32 0.0, %v950
  %v952 = vpop.f32.mrb[0].mxu0
  %v953 = vadd.f32 0.0, %v952
  %954 = vmatprep.mubr.bf16.mxu0 0
  %955 = vmatmul.mubr.bf16.gmra.mrb[0].mxu0 %v650
  %v956 = vpop.f32.mrb[0].mxu0
  %v957 = vadd.f32 0.0, %v956
  %v958 = vpop.f32.mrb[0].mxu0
  %v959 = vadd.f32 0.0, %v958
  %v960 = vpop.f32.mrb[0].mxu0
  %v961 = vadd.f32 0.0, %v960
  %v962 = vpop.f32.mrb[0].mxu0
  %v963 = vadd.f32 0.0, %v962
  %964 = vmatprep.mubr.bf16.mxu0 0
  %965 = vmatmul.mubr.bf16.gmra.mrb[0].mxu0 %v651
  %v966 = vpop.f32.mrb[0].mxu0
  %v967 = vadd.f32 0.0, %v966
  %v968 = vpop.f32.mrb[0].mxu0
  %v969 = vadd.f32 0.0, %v968
  %v970 = vpop.f32.mrb[0].mxu0
  %v971 = vadd.f32 0.0, %v970
  %v972 = vpop.f32.mrb[0].mxu0
  %v973 = vadd.f32 0.0, %v972
  %974 = vdwg.mxu0
  %975 = vmatprep.subr.bf16.mxu0 0
  %976 = vmatpush1.bf16.msra.mxu0 %v766
  %977 = vmatprep.subr.bf16.mxu0 0
  %978 = vmatpush1.bf16.msra.mxu0 %v769
  %979 = vmatprep.subr.bf16.mxu0 0
  %980 = vmatpush1.bf16.msra.mxu0 %v772
  %981 = vmatprep.subr.bf16.mxu0 0
  %982 = vmatpush1.bf16.msra.mxu0 %v775
  %983 = vmatprep.subr.bf16.mxu0 0
  %984 = vmatpush1.bf16.msra.mxu0 %v778
  %985 = vmatprep.subr.bf16.mxu0 0
  %986 = vmatpush1.bf16.msra.mxu0 %v781
  %987 = vmatprep.subr.bf16.mxu0 0
  %988 = vmatpush1.bf16.msra.mxu0 %v784
  %989 = vmatprep.subr.bf16.mxu0 0
  %990 = vmatpush1.bf16.msra.mxu0 %v787
  %991 = vmatprep.subr.bf16.mxu0 0
  %992 = vmatpush1.bf16.msra.mxu0 0
  %993 = vmatprep.subr.bf16.mxu0 0
  %994 = vmatpush1.bf16.msra.mxu0 0
  %995 = vmatprep.subr.bf16.mxu0 0
  %996 = vmatpush1.bf16.msra.mxu0 0
  %997 = vmatprep.subr.bf16.mxu0 0
  %998 = vmatpush1.bf16.msra.mxu0 0
  %999 = vmatprep.subr.bf16.mxu0 0
  %1000 = vmatpush1.bf16.msra.mxu0 0
  %1001 = vmatprep.subr.bf16.mxu0 0
  %1002 = vmatpush1.bf16.msra.mxu0 0
  %1003 = vmatprep.subr.bf16.mxu0 0
  %1004 = vmatpush1.bf16.msra.mxu0 0
  %1005 = vmatprep.subr.bf16.mxu0 0
  %1006 = vmatpush1.bf16.msra.mxu0 0
  %1007 = vmatprep.mubr.bf16.mxu0 0
  %1008 = vmatmul.mubr.bf16.gmra.mrb[0].mxu0 %v639
  %v1009 = vpop.f32.mrb[0].mxu0
  %v1010 = vadd.f32 0.0, %v1009
  %v1011 = vpop.f32.mrb[0].mxu0
  %v1012 = vpop.f32.mrb[0].mxu0
  %v1013 = vadd.f32 0.0, %v1012
  %v1014 = vpop.f32.mrb[0].mxu0
  %1015 = vmatprep.mubr.bf16.mxu0 0
  %1016 = vmatmul.mubr.bf16.gmra.mrb[0].mxu0 %v640
  %v1017 = vpop.f32.mrb[0].mxu0
  %v1018 = vadd.f32 0.0, %v1017
  %v1019 = vpop.f32.mrb[0].mxu0
  %v1020 = vpop.f32.mrb[0].mxu0
  %v1021 = vadd.f32 0.0, %v1020
  %v1022 = vpop.f32.mrb[0].mxu0
  %1023 = vmatprep.mubr.bf16.mxu0 0
  %1024 = vmatmul.mubr.bf16.gmra.mrb[0].mxu0 %v641
  %v1025 = vpop.f32.mrb[0].mxu0
  %v1026 = vadd.f32 0.0, %v1025
  %v1027 = vpop.f32.mrb[0].mxu0
  %v1028 = vpop.f32.mrb[0].mxu0
  %v1029 = vadd.f32 0.0, %v1028
  %v1030 = vpop.f32.mrb[0].mxu0
  %1031 = vmatprep.mubr.bf16.mxu0 0
  %1032 = vmatmul.mubr.bf16.gmra.mrb[0].mxu0 %v642
  %v1033 = vpop.f32.mrb[0].mxu0
  %v1034 = vadd.f32 0.0, %v1033
  %v1035 = vpop.f32.mrb[0].mxu0
  %v1036 = vpop.f32.mrb[0].mxu0
  %v1037 = vadd.f32 0.0, %v1036
  %v1038 = vpop.f32.mrb[0].mxu0
  %1039 = vmatprep.mubr.bf16.mxu0 0
  %1040 = vmatmul.mubr.bf16.gmra.mrb[0].mxu0 %v643
  %v1041 = vpop.f32.mrb[0].mxu0
  %v1042 = vadd.f32 0.0, %v1041
  %v1043 = vpop.f32.mrb[0].mxu0
  %v1044 = vpop.f32.mrb[0].mxu0
  %v1045 = vadd.f32 0.0, %v1044
  %v1046 = vpop.f32.mrb[0].mxu0
  %1047 = vmatprep.mubr.bf16.mxu0 0
  %1048 = vmatmul.mubr.bf16.gmra.mrb[0].mxu0 %v644
  %v1049 = vpop.f32.mrb[0].mxu0
  %v1050 = vadd.f32 0.0, %v1049
  %v1051 = vpop.f32.mrb[0].mxu0
  %v1052 = vpop.f32.mrb[0].mxu0
  %v1053 = vadd.f32 0.0, %v1052
  %v1054 = vpop.f32.mrb[0].mxu0
  %1055 = vmatprep.mubr.bf16.mxu0 0
  %1056 = vmatmul.mubr.bf16.gmra.mrb[0].mxu0 %v645
  %v1057 = vpop.f32.mrb[0].mxu0
  %v1058 = vadd.f32 0.0, %v1057
  %v1059 = vpop.f32.mrb[0].mxu0
  %v1060 = vpop.f32.mrb[0].mxu0
  %v1061 = vadd.f32 0.0, %v1060
  %v1062 = vpop.f32.mrb[0].mxu0
  %1063 = vmatprep.mubr.bf16.mxu0 0
  %1064 = vmatmul.mubr.bf16.gmra.mrb[0].mxu0 %v646
  %v1065 = vpop.f32.mrb[0].mxu0
  %v1066 = vadd.f32 0.0, %v1065
  %v1067 = vpop.f32.mrb[0].mxu0
  %v1068 = vpop.f32.mrb[0].mxu0
  %v1069 = vadd.f32 0.0, %v1068
  %v1070 = vpop.f32.mrb[0].mxu0
  %1071 = vmatprep.mubr.bf16.mxu0 0
  %1072 = vmatmul.mubr.bf16.gmra.mrb[0].mxu0 %v647
  %v1073 = vpop.f32.mrb[0].mxu0
  %v1074 = vadd.f32 0.0, %v1073
  %v1075 = vpop.f32.mrb[0].mxu0
  %v1076 = vpop.f32.mrb[0].mxu0
  %v1077 = vadd.f32 0.0, %v1076
  %v1078 = vpop.f32.mrb[0].mxu0
  %1079 = vmatprep.mubr.bf16.mxu0 0
  %1080 = vmatmul.mubr.bf16.gmra.mrb[0].mxu0 %v648
  %v1081 = vpop.f32.mrb[0].mxu0
  %v1082 = vadd.f32 0.0, %v1081
  %v1083 = vpop.f32.mrb[0].mxu0
  %v1084 = vpop.f32.mrb[0].mxu0
  %v1085 = vadd.f32 0.0, %v1084
  %v1086 = vpop.f32.mrb[0].mxu0
  %1087 = vmatprep.mubr.bf16.mxu0 0
  %1088 = vmatmul.mubr.bf16.gmra.mrb[0].mxu0 %v649
  %v1089 = vpop.f32.mrb[0].mxu0
  %v1090 = vadd.f32 0.0, %v1089
  %v1091 = vpop.f32.mrb[0].mxu0
  %v1092 = vpop.f32.mrb[0].mxu0
  %v1093 = vadd.f32 0.0, %v1092
  %v1094 = vpop.f32.mrb[0].mxu0
  %1095 = vmatprep.mubr.bf16.mxu0 0
  %1096 = vmatmul.mubr.bf16.gmra.mrb[0].mxu0 %v650
  %v1097 = vpop.f32.mrb[0].mxu0
  %v1098 = vadd.f32 0.0, %v1097
  %v1099 = vpop.f32.mrb[0].mxu0
  %v1100 = vpop.f32.mrb[0].mxu0
  %v1101 = vadd.f32 0.0, %v1100
  %v1102 = vpop.f32.mrb[0].mxu0
  %1103 = vmatprep.mubr.bf16.mxu0 0
  %1104 = vmatmul.mubr.bf16.gmra.mrb[0].mxu0 %v651
  %v1105 = vpop.f32.mrb[0].mxu0
  %v1106 = vadd.f32 0.0, %v1105
  %v1107 = vpop.f32.mrb[0].mxu0
  %v1108 = vpop.f32.mrb[0].mxu0
  %v1109 = vadd.f32 0.0, %v1108
  %v1110 = vpop.f32.mrb[0].mxu0
  %1111 = vdwg.mxu0
  %v1112 = vrot.slane %v847, 7
  %v1113 = vrot.slane %v851, 7
  %v1114 = vrot.slane %v857, 7
  %v1115 = vrot.slane %v861, 7
  %v1116 = vrot.slane %v867, 7
  %v1117 = vrot.slane %v871, 7
  %v1118 = vrot.slane %v877, 7
  %v1119 = vrot.slane %v881, 7
  %v1120 = vrot.slane %v887, 7
  %v1121 = vrot.slane %v891, 7
  %v1122 = vrot.slane %v897, 7
  %v1123 = vrot.slane %v901, 7
  %v1124 = vrot.slane %v907, 7
  %v1125 = vrot.slane %v911, 7
  %v1126 = vrot.slane %v917, 7
  %v1127 = vrot.slane %v921, 7
  %v1128 = vrot.slane %v927, 7
  %v1129 = vrot.slane %v931, 7
  %v1130 = vrot.slane %v937, 7
  %v1131 = vrot.slane %v941, 7
  %v1132 = vrot.slane %v947, 7
  %v1133 = vrot.slane %v951, 7
  %v1134 = vrot.slane %v957, 7
  %v1135 = vrot.slane %v961, 7
  %v1136 = vrot.slane %v967, 7
  %v1137 = vrot.slane %v971, 7
  %vm1138 = vcmp.lt.s32.totalorder %v405, 1
  %v1139 = vsel %vm1138, %v1136, %v1137
  %v1140 = vsel %vm1138, %v1135, %v1136
  %v1141 = vsel %vm1138, %v1134, %v1135
  %v1142 = vsel %vm1138, %v1133, %v1134
  %v1143 = vsel %vm1138, %v1132, %v1133
  %v1144 = vsel %vm1138, %v1131, %v1132
  %v1145 = vsel %vm1138, %v1130, %v1131
  %v1146 = vsel %vm1138, %v1129, %v1130
  %v1147 = vsel %vm1138, %v1128, %v1129
  %v1148 = vsel %vm1138, %v1127, %v1128
  %v1149 = vsel %vm1138, %v1126, %v1127
  %v1150 = vsel %vm1138, %v1125, %v1126
  %v1151 = vsel %vm1138, %v1124, %v1125
  %v1152 = vsel %vm1138, %v1123, %v1124
  %v1153 = vsel %vm1138, %v1122, %v1123
  %v1154 = vsel %vm1138, %v1121, %v1122
  %v1155 = vsel %vm1138, %v1120, %v1121
  %v1156 = vsel %vm1138, %v1119, %v1120
  %v1157 = vsel %vm1138, %v1118, %v1119
  %v1158 = vsel %vm1138, %v1117, %v1118
  %v1159 = vsel %vm1138, %v1116, %v1117
  %v1160 = vsel %vm1138, %v1115, %v1116
  %v1161 = vsel %vm1138, %v1114, %v1115
  %v1162 = vsel %vm1138, %v1113, %v1114
  %v1163 = vsel %vm1138, %v1112, %v1113
  %v1164 = vsel %vm1138, %v1137, %v1112
  %v1165 = vadd.f32 %v849, %v1164
  %v1166 = vadd.f32 %v853, %v1163
  %v1167 = vadd.f32 %v859, %v1162
  %v1168 = vadd.f32 %v863, %v1161
  %v1169 = vadd.f32 %v869, %v1160
  %v1170 = vadd.f32 %v873, %v1159
  %v1171 = vadd.f32 %v879, %v1158
  %v1172 = vadd.f32 %v883, %v1157
  %v1173 = vadd.f32 %v889, %v1156
  %v1174 = vadd.f32 %v893, %v1155
  %v1175 = vadd.f32 %v899, %v1154
  %v1176 = vadd.f32 %v903, %v1153
  %v1177 = vadd.f32 %v909, %v1152
  %v1178 = vadd.f32 %v913, %v1151
  %v1179 = vadd.f32 %v919, %v1150
  %v1180 = vadd.f32 %v923, %v1149
  %v1181 = vadd.f32 %v929, %v1148
  %v1182 = vadd.f32 %v933, %v1147
  %v1183 = vadd.f32 %v939, %v1146
  %v1184 = vadd.f32 %v943, %v1145
  %v1185 = vadd.f32 %v949, %v1144
  %v1186 = vadd.f32 %v953, %v1143
  %v1187 = vadd.f32 %v959, %v1142
  %v1188 = vadd.f32 %v963, %v1141
  %v1189 = vadd.f32 %v969, %v1140
  %v1190 = vadd.f32 %v973, %v1139
  %v1191 = vrot.slane %v1010, 1
  %v1192 = vrot.slane %v1013, 1
  %v1193 = vrot.slane %v1018, 1
  %v1194 = vrot.slane %v1021, 1
  %v1195 = vrot.slane %v1026, 1
  %v1196 = vrot.slane %v1029, 1
  %v1197 = vrot.slane %v1034, 1
  %v1198 = vrot.slane %v1037, 1
  %v1199 = vrot.slane %v1042, 1
  %v1200 = vrot.slane %v1045, 1
  %v1201 = vrot.slane %v1050, 1
  %v1202 = vrot.slane %v1053, 1
  %v1203 = vrot.slane %v1058, 1
  %v1204 = vrot.slane %v1061, 1
  %v1205 = vrot.slane %v1066, 1
  %v1206 = vrot.slane %v1069, 1
  %v1207 = vrot.slane %v1074, 1
  %v1208 = vrot.slane %v1077, 1
  %v1209 = vrot.slane %v1082, 1
  %v1210 = vrot.slane %v1085, 1
  %v1211 = vrot.slane %v1090, 1
  %v1212 = vrot.slane %v1093, 1
  %v1213 = vrot.slane %v1098, 1
  %v1214 = vrot.slane %v1101, 1
  %v1215 = vrot.slane %v1106, 1
  %v1216 = vrot.slane %v1109, 1
  %vm1217 = vcmp.lt.s32.totalorder %v405, 7
  %v1218 = vsel %vm1217, %v1215, %v1216
  %v1219 = vsel %vm1217, %v1214, %v1215
  %v1220 = vsel %vm1217, %v1213, %v1214
  %v1221 = vsel %vm1217, %v1212, %v1213
  %v1222 = vsel %vm1217, %v1211, %v1212
  %v1223 = vsel %vm1217, %v1210, %v1211
  %v1224 = vsel %vm1217, %v1209, %v1210
  %v1225 = vsel %vm1217, %v1208, %v1209
  %v1226 = vsel %vm1217, %v1207, %v1208
  %v1227 = vsel %vm1217, %v1206, %v1207
  %v1228 = vsel %vm1217, %v1205, %v1206
  %v1229 = vsel %vm1217, %v1204, %v1205
  %v1230 = vsel %vm1217, %v1203, %v1204
  %v1231 = vsel %vm1217, %v1202, %v1203
  %v1232 = vsel %vm1217, %v1201, %v1202
  %v1233 = vsel %vm1217, %v1200, %v1201
  %v1234 = vsel %vm1217, %v1199, %v1200
  %v1235 = vsel %vm1217, %v1198, %v1199
  %v1236 = vsel %vm1217, %v1197, %v1198
  %v1237 = vsel %vm1217, %v1196, %v1197
  %v1238 = vsel %vm1217, %v1195, %v1196
  %v1239 = vsel %vm1217, %v1194, %v1195
  %v1240 = vsel %vm1217, %v1193, %v1194
  %v1241 = vsel %vm1217, %v1192, %v1193
  %v1242 = vsel %vm1217, %v1191, %v1192
  %v1243 = vsel %vm1217, %v1216, %v1191
  %v1244 = vadd.f32 %v1165, %v1242
  %v1245 = vadd.f32 %v1166, %v1241
  %v1246 = vadd.f32 %v1167, %v1240
  %v1247 = vadd.f32 %v1168, %v1239
  %v1248 = vadd.f32 %v1169, %v1238
  %v1249 = vadd.f32 %v1170, %v1237
  %v1250 = vadd.f32 %v1171, %v1236
  %v1251 = vadd.f32 %v1172, %v1235
  %v1252 = vadd.f32 %v1173, %v1234
  %v1253 = vadd.f32 %v1174, %v1233
  %v1254 = vadd.f32 %v1175, %v1232
  %v1255 = vadd.f32 %v1176, %v1231
  %v1256 = vadd.f32 %v1177, %v1230
  %v1257 = vadd.f32 %v1178, %v1229
  %v1258 = vadd.f32 %v1179, %v1228
  %v1259 = vadd.f32 %v1180, %v1227
  %v1260 = vadd.f32 %v1181, %v1226
  %v1261 = vadd.f32 %v1182, %v1225
  %v1262 = vadd.f32 %v1183, %v1224
  %v1263 = vadd.f32 %v1184, %v1223
  %v1264 = vadd.f32 %v1185, %v1222
  %v1265 = vadd.f32 %v1186, %v1221
  %v1266 = vadd.f32 %v1187, %v1220
  %v1267 = vadd.f32 %v1188, %v1219
  %v1268 = vadd.f32 %v1189, %v1218
  %v1269 = vadd.f32 %v1190, %v1243
  %v1270 = vlaneseq
  %v1271 = vshrl.u32 %v1270, 7
  %v1272 = vsub.s32 3, %v1271
  %v1273 = vrot.slane %v21, %v1272
  %v1274 = vadd.f32 %v1244, %v1273
  %v1275 = vadd.f32 %v1245, %v1273
  %v1276 = vadd.f32 %v1246, %v1273
  %v1277 = vadd.f32 %v1247, %v1273
  %v1278 = vadd.f32 %v1248, %v1273
  %v1279 = vadd.f32 %v1249, %v1273
  %v1280 = vadd.f32 %v1250, %v1273
  %v1281 = vadd.f32 %v1251, %v1273
  %v1282 = vadd.f32 %v1252, %v1273
  %v1283 = vadd.f32 %v1253, %v1273
  %v1284 = vadd.f32 %v1254, %v1273
  %v1285 = vadd.f32 %v1255, %v1273
  %v1286 = vadd.f32 %v1256, %v1273
  %v1287 = vadd.f32 %v1257, %v1273
  %v1288 = vadd.f32 %v1258, %v1273
  %v1289 = vadd.f32 %v1259, %v1273
  %v1290 = vadd.f32 %v1260, %v1273
  %v1291 = vadd.f32 %v1261, %v1273
  %v1292 = vadd.f32 %v1262, %v1273
  %v1293 = vadd.f32 %v1263, %v1273
  %v1294 = vadd.f32 %v1264, %v1273
  %v1295 = vadd.f32 %v1265, %v1273
  %v1296 = vadd.f32 %v1266, %v1273
  %v1297 = vadd.f32 %v1267, %v1273
  %v1298 = vadd.f32 %v1268, %v1273
  %v1299 = vadd.f32 %v1269, %v1273
  %vm1300 = vcmp.ge.f32.partialorder %v1274, 0.0
  %vm1301 = vcmp.ge.f32.partialorder %v1275, 0.0
  %vm1302 = vcmp.ge.f32.partialorder %v1276, 0.0
  %vm1303 = vcmp.ge.f32.partialorder %v1277, 0.0
  %vm1304 = vcmp.ge.f32.partialorder %v1278, 0.0
  %vm1305 = vcmp.ge.f32.partialorder %v1279, 0.0
  %vm1306 = vcmp.ge.f32.partialorder %v1280, 0.0
  %vm1307 = vcmp.ge.f32.partialorder %v1281, 0.0
  %vm1308 = vcmp.ge.f32.partialorder %v1282, 0.0
  %vm1309 = vcmp.ge.f32.partialorder %v1283, 0.0
  %vm1310 = vcmp.ge.f32.partialorder %v1284, 0.0
  %vm1311 = vcmp.ge.f32.partialorder %v1285, 0.0
  %vm1312 = vcmp.ge.f32.partialorder %v1286, 0.0
  %vm1313 = vcmp.ge.f32.partialorder %v1287, 0.0
  %vm1314 = vcmp.ge.f32.partialorder %v1288, 0.0
  %vm1315 = vcmp.ge.f32.partialorder %v1289, 0.0
  %vm1316 = vcmp.ge.f32.partialorder %v1290, 0.0
  %vm1317 = vcmp.ge.f32.partialorder %v1291, 0.0
  %vm1318 = vcmp.ge.f32.partialorder %v1292, 0.0
  %vm1319 = vcmp.ge.f32.partialorder %v1293, 0.0
  %vm1320 = vcmp.ge.f32.partialorder %v1294, 0.0
  %vm1321 = vcmp.ge.f32.partialorder %v1295, 0.0
  %vm1322 = vcmp.ge.f32.partialorder %v1296, 0.0
  %vm1323 = vcmp.ge.f32.partialorder %v1297, 0.0
  %vm1324 = vcmp.ge.f32.partialorder %v1298, 0.0
  %vm1325 = vcmp.ge.f32.partialorder %v1299, 0.0
  %v1326 = vmul.f32 %v1274, 0.2
  %v1327 = vmul.f32 %v1275, 0.2
  %v1328 = vmul.f32 %v1276, 0.2
  %v1329 = vmul.f32 %v1277, 0.2
  %v1330 = vmul.f32 %v1278, 0.2
  %v1331 = vmul.f32 %v1279, 0.2
  %v1332 = vmul.f32 %v1280, 0.2
  %v1333 = vmul.f32 %v1281, 0.2
  %v1334 = vmul.f32 %v1282, 0.2
  %v1335 = vmul.f32 %v1283, 0.2
  %v1336 = vmul.f32 %v1284, 0.2
  %v1337 = vmul.f32 %v1285, 0.2
  %v1338 = vmul.f32 %v1286, 0.2
  %v1339 = vmul.f32 %v1287, 0.2
  %v1340 = vmul.f32 %v1288, 0.2
  %v1341 = vmul.f32 %v1289, 0.2
  %v1342 = vmul.f32 %v1290, 0.2
  %v1343 = vmul.f32 %v1291, 0.2
  %v1344 = vmul.f32 %v1292, 0.2
  %v1345 = vmul.f32 %v1293, 0.2
  %v1346 = vmul.f32 %v1294, 0.2
  %v1347 = vmul.f32 %v1295, 0.2
  %v1348 = vmul.f32 %v1296, 0.2
  %v1349 = vmul.f32 %v1297, 0.2
  %v1350 = vmul.f32 %v1298, 0.2
  %v1351 = vmul.f32 %v1299, 0.2
  %v1352 = vsel %vm1300, %v1274, %v1326
  %v1353 = vsel %vm1301, %v1275, %v1327
  %v1354 = vsel %vm1302, %v1276, %v1328
  %v1355 = vsel %vm1303, %v1277, %v1329
  %v1356 = vsel %vm1304, %v1278, %v1330
  %v1357 = vsel %vm1305, %v1279, %v1331
  %v1358 = vsel %vm1306, %v1280, %v1332
  %v1359 = vsel %vm1307, %v1281, %v1333
  %v1360 = vsel %vm1308, %v1282, %v1334
  %v1361 = vsel %vm1309, %v1283, %v1335
  %v1362 = vsel %vm1310, %v1284, %v1336
  %v1363 = vsel %vm1311, %v1285, %v1337
  %v1364 = vsel %vm1312, %v1286, %v1338
  %v1365 = vsel %vm1313, %v1287, %v1339
  %v1366 = vsel %vm1314, %v1288, %v1340
  %v1367 = vsel %vm1315, %v1289, %v1341
  %v1368 = vsel %vm1316, %v1290, %v1342
  %v1369 = vsel %vm1317, %v1291, %v1343
  %v1370 = vsel %vm1318, %v1292, %v1344
  %v1371 = vsel %vm1319, %v1293, %v1345
  %v1372 = vsel %vm1320, %v1294, %v1346
  %v1373 = vsel %vm1321, %v1295, %v1347
  %v1374 = vsel %vm1322, %v1296, %v1348
  %v1375 = vsel %vm1323, %v1297, %v1349
  %v1376 = vsel %vm1324, %v1298, %v1350
  %v1377 = vsel %vm1325, %v1299, %v1351
  %v1378 = vpack.c.bf16 %v1353, %v1352
  %v1379 = vpack.c.bf16 %v1355, %v1354
  %v1380 = vpack.c.bf16 %v1357, %v1356
  %v1381 = vpack.c.bf16 %v1359, %v1358
  %v1382 = vpack.c.bf16 %v1361, %v1360
  %v1383 = vpack.c.bf16 %v1363, %v1362
  %v1384 = vpack.c.bf16 %v1365, %v1364
  %v1385 = vpack.c.bf16 %v1367, %v1366
  %v1386 = vpack.c.bf16 %v1369, %v1368
  %v1387 = vpack.c.bf16 %v1371, %v1370
  %v1388 = vpack.c.bf16 %v1373, %v1372
  %v1389 = vpack.c.bf16 %v1375, %v1374
  %v1390 = vpack.c.bf16 %v1377, %v1376
  %v1391 = vld [vmem:[%s3] sm:$0xf]
  %v1392 = vld [vmem:[%s3 + $0x4] sm:$0xf]
  %v1393 = vld [vmem:[%s3 + $0x8] sm:$0xf]
  %v1394 = vld [vmem:[%s3 + $0xc] sm:$0xf]
  %v1395 = vld [vmem:[%s3 + $0x10] sm:$0xf]
  %v1396 = vld [vmem:[%s3 + $0x14] sm:$0xf]
  %v1397 = vld [vmem:[%s3 + $0x18] sm:$0xf]
  %v1398 = vld [vmem:[%s3 + $0x1c] sm:$0xf]
  %v1399 = vld [vmem:[%s3 + $0x20] sm:$0xf]
  %v1400 = vld [vmem:[%s3 + $0x24] sm:$0xf]
  %v1401 = vld [vmem:[%s3 + $0x28] sm:$0xf]
  %v1402 = vld [vmem:[%s3 + $0x2c] sm:$0xf]
  %v1403 = vld [vmem:[%s3 + $0x30] sm:$0xf]
  %v1404 = vld [vmem:[%s3 + $0x34] sm:$0xf]
  %v1405 = vld [vmem:[%s3 + $0x38] sm:$0xf]
  %v1406 = vld [vmem:[%s3 + $0x3c] sm:$0xf]
  %v1407 = vlaneseq
  %v1408 = vshrl.u32 %v1407, 7
  %v1409 = vsub.s32 4, %v1408
  %v1410 = vrot.slane %v21, %v1409
  %v1427 = vunpack.c.l.b16 %v1391
  %v1428 = vunpack.c.l.b16 %v1392
  %v1429 = vunpack.c.l.b16 %v1393
  %v1430 = vunpack.c.l.b16 %v1394
  %v1431 = vunpack.c.l.b16 %v1395
  %v1432 = vunpack.c.l.b16 %v1396
  %v1433 = vunpack.c.l.b16 %v1397
  %v1434 = vunpack.c.l.b16 %v1398
  %v1435 = vunpack.c.l.b16 %v1399
  %v1436 = vunpack.c.l.b16 %v1400
  %v1437 = vunpack.c.l.b16 %v1401
  %v1438 = vunpack.c.l.b16 %v1402
  %v1439 = vunpack.c.l.b16 %v1403
  %v1440 = vunpack.c.l.b16 %v1404
  %v1441 = vunpack.c.l.b16 %v1405
  %v1442 = vunpack.c.l.b16 %v1406
  %v1443 = vpack.c.b16 %v1428, %v1427
  %v1444 = vpack.c.b16 %v1430, %v1429
  %v1445 = vpack.c.b16 %v1432, %v1431
  %v1446 = vpack.c.b16 %v1434, %v1433
  %v1447 = vpack.c.b16 %v1436, %v1435
  %v1448 = vpack.c.b16 %v1438, %v1437
  %v1449 = vpack.c.b16 %v1440, %v1439
  %v1450 = vpack.c.b16 %v1442, %v1441
  %1459 = vmatprep.subr.bf16.mxu0 0
  %1460 = vmatpush1.bf16.msra.mxu0 %v1443
  %1461 = vmatprep.subr.bf16.mxu0 0
  %1462 = vmatpush1.bf16.msra.mxu0 %v1444
  %1463 = vmatprep.subr.bf16.mxu0 0
  %1464 = vmatpush1.bf16.msra.mxu0 %v1445
  %1465 = vmatprep.subr.bf16.mxu0 0
  %1466 = vmatpush1.bf16.msra.mxu0 %v1446
  %1467 = vmatprep.subr.bf16.mxu0 0
  %1468 = vmatpush1.bf16.msra.mxu0 %v1447
  %1469 = vmatprep.subr.bf16.mxu0 0
  %1470 = vmatpush1.bf16.msra.mxu0 %v1448
  %1471 = vmatprep.subr.bf16.mxu0 0
  %1472 = vmatpush1.bf16.msra.mxu0 %v1449
  %1473 = vmatprep.subr.bf16.mxu0 0
  %1474 = vmatpush1.bf16.msra.mxu0 %v1450
  %1475 = vmatprep.subr.bf16.mxu0 0
  %1476 = vmatpush1.bf16.msra.mxu0 0
  %1477 = vmatprep.subr.bf16.mxu0 0
  %1478 = vmatpush1.bf16.msra.mxu0 0
  %1479 = vmatprep.subr.bf16.mxu0 0
  %1480 = vmatpush1.bf16.msra.mxu0 0
  %1481 = vmatprep.subr.bf16.mxu0 0
  %1482 = vmatpush1.bf16.msra.mxu0 0
  %1483 = vmatprep.subr.bf16.mxu0 0
  %1484 = vmatpush1.bf16.msra.mxu0 0
  %1485 = vmatprep.subr.bf16.mxu0 0
  %1486 = vmatpush1.bf16.msra.mxu0 0
  %1487 = vmatprep.subr.bf16.mxu0 0
  %1488 = vmatpush1.bf16.msra.mxu0 0
  %1489 = vmatprep.subr.bf16.mxu0 0
  %1490 = vmatpush1.bf16.msra.mxu0 0
  %1491 = vmatprep.mubr.bf16.mxu0 0
  %1492 = vmatmul.mubr.bf16.gmra.mrb[0].mxu0 %v1378
  %v1493 = vpop.f32.mrb[0].mxu0
  %v1494 = vadd.f32 %v1410, %v1493
  %v1495 = vpop.f32.mrb[0].mxu0
  %v1496 = vpop.f32.mrb[0].mxu0
  %v1497 = vadd.f32 %v1410, %v1496
  %v1498 = vpop.f32.mrb[0].mxu0
  %1499 = vmatprep.mubr.bf16.mxu0 0
  %1500 = vmatmul.mubr.bf16.gmra.mrb[0].mxu0 %v1379
  %v1501 = vpop.f32.mrb[0].mxu0
  %v1502 = vadd.f32 %v1410, %v1501
  %v1503 = vpop.f32.mrb[0].mxu0
  %v1504 = vpop.f32.mrb[0].mxu0
  %v1505 = vadd.f32 %v1410, %v1504
  %v1506 = vpop.f32.mrb[0].mxu0
  %1507 = vmatprep.mubr.bf16.mxu0 0
  %1508 = vmatmul.mubr.bf16.gmra.mrb[0].mxu0 %v1380
  %v1509 = vpop.f32.mrb[0].mxu0
  %v1510 = vadd.f32 %v1410, %v1509
  %v1511 = vpop.f32.mrb[0].mxu0
  %v1512 = vpop.f32.mrb[0].mxu0
  %v1513 = vadd.f32 %v1410, %v1512
  %v1514 = vpop.f32.mrb[0].mxu0
  %1515 = vmatprep.mubr.bf16.mxu0 0
  %1516 = vmatmul.mubr.bf16.gmra.mrb[0].mxu0 %v1381
  %v1517 = vpop.f32.mrb[0].mxu0
  %v1518 = vadd.f32 %v1410, %v1517
  %v1519 = vpop.f32.mrb[0].mxu0
  %v1520 = vpop.f32.mrb[0].mxu0
  %v1521 = vadd.f32 %v1410, %v1520
  %v1522 = vpop.f32.mrb[0].mxu0
  %1523 = vmatprep.mubr.bf16.mxu0 0
  %1524 = vmatmul.mubr.bf16.gmra.mrb[0].mxu0 %v1382
  %v1525 = vpop.f32.mrb[0].mxu0
  %v1526 = vadd.f32 %v1410, %v1525
  %v1527 = vpop.f32.mrb[0].mxu0
  %v1528 = vpop.f32.mrb[0].mxu0
  %v1529 = vadd.f32 %v1410, %v1528
  %v1530 = vpop.f32.mrb[0].mxu0
  %1531 = vmatprep.mubr.bf16.mxu0 0
  %1532 = vmatmul.mubr.bf16.gmra.mrb[0].mxu0 %v1383
  %v1533 = vpop.f32.mrb[0].mxu0
  %v1534 = vadd.f32 %v1410, %v1533
  %v1535 = vpop.f32.mrb[0].mxu0
  %v1536 = vpop.f32.mrb[0].mxu0
  %v1537 = vadd.f32 %v1410, %v1536
  %v1538 = vpop.f32.mrb[0].mxu0
  %1539 = vmatprep.mubr.bf16.mxu0 0
  %1540 = vmatmul.mubr.bf16.gmra.mrb[0].mxu0 %v1384
  %v1541 = vpop.f32.mrb[0].mxu0
  %v1542 = vadd.f32 %v1410, %v1541
  %v1543 = vpop.f32.mrb[0].mxu0
  %v1544 = vpop.f32.mrb[0].mxu0
  %v1545 = vadd.f32 %v1410, %v1544
  %v1546 = vpop.f32.mrb[0].mxu0
  %1547 = vmatprep.mubr.bf16.mxu0 0
  %1548 = vmatmul.mubr.bf16.gmra.mrb[0].mxu0 %v1385
  %v1549 = vpop.f32.mrb[0].mxu0
  %v1550 = vadd.f32 %v1410, %v1549
  %v1551 = vpop.f32.mrb[0].mxu0
  %v1552 = vpop.f32.mrb[0].mxu0
  %v1553 = vadd.f32 %v1410, %v1552
  %v1554 = vpop.f32.mrb[0].mxu0
  %1555 = vmatprep.mubr.bf16.mxu0 0
  %1556 = vmatmul.mubr.bf16.gmra.mrb[0].mxu0 %v1386
  %v1557 = vpop.f32.mrb[0].mxu0
  %v1558 = vadd.f32 %v1410, %v1557
  %v1559 = vpop.f32.mrb[0].mxu0
  %v1560 = vpop.f32.mrb[0].mxu0
  %v1561 = vadd.f32 %v1410, %v1560
  %v1562 = vpop.f32.mrb[0].mxu0
  %1563 = vmatprep.mubr.bf16.mxu0 0
  %1564 = vmatmul.mubr.bf16.gmra.mrb[0].mxu0 %v1387
  %v1565 = vpop.f32.mrb[0].mxu0
  %v1566 = vadd.f32 %v1410, %v1565
  %v1567 = vpop.f32.mrb[0].mxu0
  %v1568 = vpop.f32.mrb[0].mxu0
  %v1569 = vadd.f32 %v1410, %v1568
  %v1570 = vpop.f32.mrb[0].mxu0
  %1571 = vmatprep.mubr.bf16.mxu0 0
  %1572 = vmatmul.mubr.bf16.gmra.mrb[0].mxu0 %v1388
  %v1573 = vpop.f32.mrb[0].mxu0
  %v1574 = vadd.f32 %v1410, %v1573
  %v1575 = vpop.f32.mrb[0].mxu0
  %v1576 = vpop.f32.mrb[0].mxu0
  %v1577 = vadd.f32 %v1410, %v1576
  %v1578 = vpop.f32.mrb[0].mxu0
  %1579 = vmatprep.mubr.bf16.mxu0 0
  %1580 = vmatmul.mubr.bf16.gmra.mrb[0].mxu0 %v1389
  %v1581 = vpop.f32.mrb[0].mxu0
  %v1582 = vadd.f32 %v1410, %v1581
  %v1583 = vpop.f32.mrb[0].mxu0
  %v1584 = vpop.f32.mrb[0].mxu0
  %v1585 = vadd.f32 %v1410, %v1584
  %v1586 = vpop.f32.mrb[0].mxu0
  %1587 = vmatprep.mubr.bf16.mxu0 0
  %1588 = vmatmul.mubr.bf16.gmra.mrb[0].mxu0 %v1390
  %v1589 = vpop.f32.mrb[0].mxu0
  %v1590 = vadd.f32 %v1410, %v1589
  %v1591 = vpop.f32.mrb[0].mxu0
  %v1592 = vpop.f32.mrb[0].mxu0
  %v1593 = vadd.f32 %v1410, %v1592
  %v1594 = vpop.f32.mrb[0].mxu0
  %1595 = vdwg.mxu0
  %vm1596 = vcmp.ge.f32.partialorder %v1494, 0.0
  %vm1597 = vcmp.ge.f32.partialorder %v1497, 0.0
  %vm1598 = vcmp.ge.f32.partialorder %v1502, 0.0
  %vm1599 = vcmp.ge.f32.partialorder %v1505, 0.0
  %vm1600 = vcmp.ge.f32.partialorder %v1510, 0.0
  %vm1601 = vcmp.ge.f32.partialorder %v1513, 0.0
  %vm1602 = vcmp.ge.f32.partialorder %v1518, 0.0
  %vm1603 = vcmp.ge.f32.partialorder %v1521, 0.0
  %vm1604 = vcmp.ge.f32.partialorder %v1526, 0.0
  %vm1605 = vcmp.ge.f32.partialorder %v1529, 0.0
  %vm1606 = vcmp.ge.f32.partialorder %v1534, 0.0
  %vm1607 = vcmp.ge.f32.partialorder %v1537, 0.0
  %vm1608 = vcmp.ge.f32.partialorder %v1542, 0.0
  %vm1609 = vcmp.ge.f32.partialorder %v1545, 0.0
  %vm1610 = vcmp.ge.f32.partialorder %v1550, 0.0
  %vm1611 = vcmp.ge.f32.partialorder %v1553, 0.0
  %vm1612 = vcmp.ge.f32.partialorder %v1558, 0.0
  %vm1613 = vcmp.ge.f32.partialorder %v1561, 0.0
  %vm1614 = vcmp.ge.f32.partialorder %v1566, 0.0
  %vm1615 = vcmp.ge.f32.partialorder %v1569, 0.0
  %vm1616 = vcmp.ge.f32.partialorder %v1574, 0.0
  %vm1617 = vcmp.ge.f32.partialorder %v1577, 0.0
  %vm1618 = vcmp.ge.f32.partialorder %v1582, 0.0
  %vm1619 = vcmp.ge.f32.partialorder %v1585, 0.0
  %vm1620 = vcmp.ge.f32.partialorder %v1590, 0.0
  %vm1621 = vcmp.ge.f32.partialorder %v1593, 0.0
  %v1622 = vmul.f32 %v1494, 0.2
  %v1623 = vmul.f32 %v1497, 0.2
  %v1624 = vmul.f32 %v1502, 0.2
  %v1625 = vmul.f32 %v1505, 0.2
  %v1626 = vmul.f32 %v1510, 0.2
  %v1627 = vmul.f32 %v1513, 0.2
  %v1628 = vmul.f32 %v1518, 0.2
  %v1629 = vmul.f32 %v1521, 0.2
  %v1630 = vmul.f32 %v1526, 0.2
  %v1631 = vmul.f32 %v1529, 0.2
  %v1632 = vmul.f32 %v1534, 0.2
  %v1633 = vmul.f32 %v1537, 0.2
  %v1634 = vmul.f32 %v1542, 0.2
  %v1635 = vmul.f32 %v1545, 0.2
  %v1636 = vmul.f32 %v1550, 0.2
  %v1637 = vmul.f32 %v1553, 0.2
  %v1638 = vmul.f32 %v1558, 0.2
  %v1639 = vmul.f32 %v1561, 0.2
  %v1640 = vmul.f32 %v1566, 0.2
  %v1641 = vmul.f32 %v1569, 0.2
  %v1642 = vmul.f32 %v1574, 0.2
  %v1643 = vmul.f32 %v1577, 0.2
  %v1644 = vmul.f32 %v1582, 0.2
  %v1645 = vmul.f32 %v1585, 0.2
  %v1646 = vmul.f32 %v1590, 0.2
  %v1647 = vmul.f32 %v1593, 0.2
  %v1648 = vsel %vm1596, %v1494, %v1622
  %v1649 = vsel %vm1597, %v1497, %v1623
  %v1650 = vsel %vm1598, %v1502, %v1624
  %v1651 = vsel %vm1599, %v1505, %v1625
  %v1652 = vsel %vm1600, %v1510, %v1626
  %v1653 = vsel %vm1601, %v1513, %v1627
  %v1654 = vsel %vm1602, %v1518, %v1628
  %v1655 = vsel %vm1603, %v1521, %v1629
  %v1656 = vsel %vm1604, %v1526, %v1630
  %v1657 = vsel %vm1605, %v1529, %v1631
  %v1658 = vsel %vm1606, %v1534, %v1632
  %v1659 = vsel %vm1607, %v1537, %v1633
  %v1660 = vsel %vm1608, %v1542, %v1634
  %v1661 = vsel %vm1609, %v1545, %v1635
  %v1662 = vsel %vm1610, %v1550, %v1636
  %v1663 = vsel %vm1611, %v1553, %v1637
  %v1664 = vsel %vm1612, %v1558, %v1638
  %v1665 = vsel %vm1613, %v1561, %v1639
  %v1666 = vsel %vm1614, %v1566, %v1640
  %v1667 = vsel %vm1615, %v1569, %v1641
  %v1668 = vsel %vm1616, %v1574, %v1642
  %v1669 = vsel %vm1617, %v1577, %v1643
  %v1670 = vsel %vm1618, %v1582, %v1644
  %v1671 = vsel %vm1619, %v1585, %v1645
  %v1672 = vsel %vm1620, %v1590, %v1646
  %v1673 = vsel %vm1621, %v1593, %v1647
  %v1674 = vlaneseq
  %v1675 = vshrl.u32 %v1674, 7
  %v1676 = vsub.s32 5, %v1675
  %v1677 = vrot.slane %v21, %v1676
  %v1678 = vmul.f32 %v1648, %v1677
  %v1679 = vmul.f32 %v1649, %v1677
  %v1680 = vmul.f32 %v1650, %v1677
  %v1681 = vmul.f32 %v1651, %v1677
  %v1682 = vmul.f32 %v1652, %v1677
  %v1683 = vmul.f32 %v1653, %v1677
  %v1684 = vmul.f32 %v1654, %v1677
  %v1685 = vmul.f32 %v1655, %v1677
  %v1686 = vmul.f32 %v1656, %v1677
  %v1687 = vmul.f32 %v1657, %v1677
  %v1688 = vmul.f32 %v1658, %v1677
  %v1689 = vmul.f32 %v1659, %v1677
  %v1690 = vmul.f32 %v1660, %v1677
  %v1691 = vmul.f32 %v1661, %v1677
  %v1692 = vmul.f32 %v1662, %v1677
  %v1693 = vmul.f32 %v1663, %v1677
  %v1694 = vmul.f32 %v1664, %v1677
  %v1695 = vmul.f32 %v1665, %v1677
  %v1696 = vmul.f32 %v1666, %v1677
  %v1697 = vmul.f32 %v1667, %v1677
  %v1698 = vmul.f32 %v1668, %v1677
  %v1699 = vmul.f32 %v1669, %v1677
  %v1700 = vmul.f32 %v1670, %v1677
  %v1701 = vmul.f32 %v1671, %v1677
  %v1702 = vmul.f32 %v1672, %v1677
  %v1703 = vmul.f32 %v1673, %v1677
  %v1704 = vlaneseq
  %v1705 = vshrl.u32 %v1704, 7
  %v1706 = vsub.s32 6, %v1705
  %v1707 = vrot.slane %v21, %v1706
  %v1708 = vadd.f32 %v1678, %v1707
  %v1709 = vadd.f32 %v1679, %v1707
  %v1710 = vadd.f32 %v1680, %v1707
  %v1711 = vadd.f32 %v1681, %v1707
  %v1712 = vadd.f32 %v1682, %v1707
  %v1713 = vadd.f32 %v1683, %v1707
  %v1714 = vadd.f32 %v1684, %v1707
  %v1715 = vadd.f32 %v1685, %v1707
  %v1716 = vadd.f32 %v1686, %v1707
  %v1717 = vadd.f32 %v1687, %v1707
  %v1718 = vadd.f32 %v1688, %v1707
  %v1719 = vadd.f32 %v1689, %v1707
  %v1720 = vadd.f32 %v1690, %v1707
  %v1721 = vadd.f32 %v1691, %v1707
  %v1722 = vadd.f32 %v1692, %v1707
  %v1723 = vadd.f32 %v1693, %v1707
  %v1724 = vadd.f32 %v1694, %v1707
  %v1725 = vadd.f32 %v1695, %v1707
  %v1726 = vadd.f32 %v1696, %v1707
  %v1727 = vadd.f32 %v1697, %v1707
  %v1728 = vadd.f32 %v1698, %v1707
  %v1729 = vadd.f32 %v1699, %v1707
  %v1730 = vadd.f32 %v1700, %v1707
  %v1731 = vadd.f32 %v1701, %v1707
  %v1732 = vadd.f32 %v1702, %v1707
  %v1733 = vadd.f32 %v1703, %v1707
  %v1734 = vadd.f32 %v1708, %v22
  %v1735 = vadd.f32 %v1709, %v23
  %v1736 = vadd.f32 %v1710, %v24
  %v1737 = vadd.f32 %v1711, %v25
  %v1738 = vadd.f32 %v1712, %v26
  %v1739 = vadd.f32 %v1713, %v27
  %v1740 = vadd.f32 %v1714, %v28
  %v1741 = vadd.f32 %v1715, %v29
  %v1742 = vadd.f32 %v1716, %v30
  %v1743 = vadd.f32 %v1717, %v31
  %v1744 = vadd.f32 %v1718, %v32
  %v1745 = vadd.f32 %v1719, %v33
  %v1746 = vadd.f32 %v1720, %v34
  %v1747 = vadd.f32 %v1721, %v35
  %v1748 = vadd.f32 %v1722, %v36
  %v1749 = vadd.f32 %v1723, %v37
  %v1750 = vadd.f32 %v1724, %v38
  %v1751 = vadd.f32 %v1725, %v39
  %v1752 = vadd.f32 %v1726, %v40
  %v1753 = vadd.f32 %v1727, %v41
  %v1754 = vadd.f32 %v1728, %v42
  %v1755 = vadd.f32 %v1729, %v43
  %v1756 = vadd.f32 %v1730, %v44
  %v1757 = vadd.f32 %v1731, %v45
  %v1758 = vadd.f32 %v1732, %v46
  %v1759 = vadd.f32 %v1733, %v47
  %v1760 = vmax.f32 %v1734, 0.0
  %v1761 = vmax.f32 %v1735, 0.0
  %v1762 = vmax.f32 %v1736, 0.0
  %v1763 = vmax.f32 %v1737, 0.0
  %v1764 = vmax.f32 %v1738, 0.0
  %v1765 = vmax.f32 %v1739, 0.0
  %v1766 = vmax.f32 %v1740, 0.0
  %v1767 = vmax.f32 %v1741, 0.0
  %v1768 = vmax.f32 %v1742, 0.0
  %v1769 = vmax.f32 %v1743, 0.0
  %v1770 = vmax.f32 %v1744, 0.0
  %v1771 = vmax.f32 %v1745, 0.0
  %v1772 = vmax.f32 %v1746, 0.0
  %v1773 = vmax.f32 %v1747, 0.0
  %v1774 = vmax.f32 %v1748, 0.0
  %v1775 = vmax.f32 %v1749, 0.0
  %v1776 = vmax.f32 %v1750, 0.0
  %v1777 = vmax.f32 %v1751, 0.0
  %v1778 = vmax.f32 %v1752, 0.0
  %v1779 = vmax.f32 %v1753, 0.0
  %v1780 = vmax.f32 %v1754, 0.0
  %v1781 = vmax.f32 %v1755, 0.0
  %v1782 = vmax.f32 %v1756, 0.0
  %v1783 = vmax.f32 %v1757, 0.0
  %v1784 = vmax.f32 %v1758, 0.0
  %v1785 = vmax.f32 %v1759, 0.0
  %1786 = vst [vmem:[%s5] sm:$0xff] %v1760
  %1787 = vst [vmem:[%s5 + $0x8] sm:$0xff] %v1761
  %1788 = vst [vmem:[%s5 + $0x10] sm:$0xff] %v1762
  %1789 = vst [vmem:[%s5 + $0x18] sm:$0xff] %v1763
  %1790 = vst [vmem:[%s5 + $0x20] sm:$0xff] %v1764
  %1791 = vst [vmem:[%s5 + $0x28] sm:$0xff] %v1765
  %1792 = vst [vmem:[%s5 + $0x30] sm:$0xff] %v1766
  %1793 = vst [vmem:[%s5 + $0x38] sm:$0xff] %v1767
  %1794 = vst [vmem:[%s5 + $0x40] sm:$0xff] %v1768
  %1795 = vst [vmem:[%s5 + $0x48] sm:$0xff] %v1769
  %1796 = vst [vmem:[%s5 + $0x50] sm:$0xff] %v1770
  %1797 = vst [vmem:[%s5 + $0x58] sm:$0xff] %v1771
  %1798 = vst [vmem:[%s5 + $0x60] sm:$0xff] %v1772
  %1799 = vst [vmem:[%s5 + $0x68] sm:$0xff] %v1773
  %1800 = vst [vmem:[%s5 + $0x70] sm:$0xff] %v1774
  %1801 = vst [vmem:[%s5 + $0x78] sm:$0xff] %v1775
  %1802 = vst [vmem:[%s5 + $0x80] sm:$0xff] %v1776
  %1803 = vst [vmem:[%s5 + $0x88] sm:$0xff] %v1777
  %1804 = vst [vmem:[%s5 + $0x90] sm:$0xff] %v1778
  %1805 = vst [vmem:[%s5 + $0x98] sm:$0xff] %v1779
  %1806 = vst [vmem:[%s5 + $0xa0] sm:$0xff] %v1780
  %1807 = vst [vmem:[%s5 + $0xa8] sm:$0xff] %v1781
  %1808 = vst [vmem:[%s5 + $0xb0] sm:$0xff] %v1782
  %1809 = vst [vmem:[%s5 + $0xb8] sm:$0xff] %v1783
  %1810 = vst [vmem:[%s5 + $0xc0] sm:$0xff] %v1784
  %1811 = vst [vmem:[%s5 + $0xc8] sm:$0xff] %v1785
  // Predicated region
  $region22: #{res_bottleneck_block_pallas.1} parent=0 // pred_check
    _
  $region23: #{res_bottleneck_block_pallas.1} parent=0 // pred_check_branch
    %1813 = sbr.rel (0) target = $region25
  $region24: #{res_bottleneck_block_pallas.1} parent=0 // pred_region
    _
  $region25: #{res_bottleneck_block_pallas.1} parent=0 // pred_fallthru
    _
  // Predicated region
  $region26: #{res_bottleneck_block_pallas.1} parent=0 // pred_check
    _
  $region27: #{res_bottleneck_block_pallas.1} parent=0 // pred_check_branch
    %1815 = sbr.rel (0) target = $region29
  $region28: #{res_bottleneck_block_pallas.1} parent=0 // pred_region
    _
  $region29: #{res_bottleneck_block_pallas.1} parent=0 // pred_fallthru
    _

</llo_original>
